<compile_context>
chip_gen: v5e
topology: v5e:2x2
jax: 0.10.0
libtpu: 0.0.40
codegen_flags: <defaults>
</compile_context>

<pallas_src>
import math
import functools

import jax
import jax.numpy as jnp
from jax.experimental import pallas as pl
from jax.experimental.pallas import tpu as pltpu


def _round_up(x, m):
    return ((x + m - 1) // m) * m


@functools.lru_cache(maxsize=None)
def _vmem_capacity_bytes():
    """Per-core VMEM capacity; falls back to the v5e/v6e value (128 MiB)."""
    try:
        return int(pltpu.get_tpu_info().vmem_capacity_bytes)
    except Exception:
        return 128 * 1024 * 1024


def _const_block_spec(shape, pipeline_mode):
    """Grid-invariant operand spec; only touches pipeline_mode when asked."""
    if pipeline_mode is None:
        return pl.BlockSpec(shape, lambda i: (0,) * len(shape))
    return pl.BlockSpec(shape, lambda i: (0,) * len(shape),
                        pipeline_mode=pipeline_mode)


# ---------------------------------------------------------------------------
# Kernel 1: fused Soft-Nearest-Neighbour classifier (anchor + target queries)
# ---------------------------------------------------------------------------
def _snn_probs(q_ref, pn_ref, bias_ref, *, mask_padded):
    q = q_ref[...].astype(jnp.float32)                       # (tm, Dp)
    # torch.nn.functional.normalize(dim=1): x / max(||x||, 1e-12)
    qn = (q * jax.lax.rsqrt(
        jnp.maximum(jnp.sum(q * q, axis=1, keepdims=True), 1e-24))
          ).astype(jnp.bfloat16)
    # 1/tau is already folded into pn (wrapper), so no logits scaling here.
    logits = jnp.dot(qn, pn_ref[...],
                     preferred_element_type=jnp.float32)     # (tm, Kp)
    if mask_padded:
        logits = logits + bias_ref[...]                      # (1, Kp) add mask
    logits = logits - jnp.max(logits, axis=1, keepdims=True)
    e = jnp.exp(logits)
    return e * pl.reciprocal(jnp.sum(e, axis=1, keepdims=True), approx=True)


def _snn_kernel_identity(q_ref, pn_ref, bias_ref, out_ref, *, mask_padded):
    # proto_labels == I_K: probs are the softmax itself (skip the 2nd matmul).
    out_ref[...] = _snn_probs(q_ref, pn_ref, bias_ref, mask_padded=mask_padded)


def _snn_kernel_soft(q_ref, pn_ref, bias_ref, lbl_ref, out_ref, *, mask_padded):
    sm = _snn_probs(q_ref, pn_ref, bias_ref, mask_padded=mask_padded)
    # f32 MXU matmul for the soft-label fallback (keeps log(probs) precise).
    out_ref[...] = jnp.dot(sm, lbl_ref[...],
                           preferred_element_type=jnp.float32)


def snn_fused(query, pn_t, kbias, labels_p=None, *, mask_padded, tm_max=None):
    """query: (N, D) float; pn_t: (Dp, Kp) bf16 L2-normalized, pre-scaled by
    1/tau, transposed; kbias: (1, Kp) f32 additive mask for padded prototype
    columns; labels_p: (Kp, Cp) f32 soft labels or None for identity labels.
    Returns the padded (Np, Cout) f32 probability array (rows >= N are
    finite garbage and must be ignored by the caller)."""
    N, D = query.shape
    Dp, Kp = pn_t.shape
    Cout = Kp if labels_p is None else labels_p.shape[1]

    cap = _vmem_capacity_bytes()
    budget = (cap * 3) // 4                      # never request full physical VMEM
    if tm_max is None:
        # v7x (64 MiB/TC): small tiles; v5e/v6e (128 MiB): go big.
        tm_max = 128 if cap <= 96 * 2**20 else 512

    const_bytes = Dp * Kp * 2 + 8 * Kp * 4
    if labels_p is not None:
        const_bytes += Kp * Cout * 4
    # Single-buffer grid-invariant operands only when they are big enough to
    # matter (constant index_map => double-buffering is pure VMEM waste).
    const_mode = pl.Buffered(1) if const_bytes > 2 * 2**20 else None
    nbuf_const = 1 if const_mode is not None else 2

    n8 = _round_up(N, 8)
    tm = min(_round_up(tm_max, 8), n8)
    # >= 2 grid steps so megacore / both v7x TensorCores get work.
    if n8 > 8 and (n8 + tm - 1) // tm < 2:
        tm = min(tm, _round_up((n8 + 1) // 2, 8))

    def _foot(t):                                # rough per-call VMEM footprint
        return (2 * t * Dp * 2                   # q tile (bf16, double-buffered)
                + 2 * t * Cout * 4               # out tile (f32, double-buffered)
                + nbuf_const * const_bytes       # grid-invariant operands
                + t * Dp * 4 + 3 * t * Kp * 4 + t * Cout * 4)  # live f32 temps

    while tm > 8 and _foot(tm) > budget:
        tm = max(8, _round_up(tm // 2, 8))
    Np = _round_up(n8, tm)
    vmem_limit = int(min(budget, max(32 * 2**20, 2 * _foot(tm))))

    q = jnp.pad(query.astype(jnp.bfloat16), ((0, Np - N), (0, Dp - D)))

    in_specs = [pl.BlockSpec((tm, Dp), lambda i: (i, 0)),
                _const_block_spec((Dp, Kp), const_mode),
                _const_block_spec((1, Kp), const_mode)]
    operands = [q, pn_t, kbias]
    if labels_p is None:
        kern = functools.partial(_snn_kernel_identity, mask_padded=mask_padded)
    else:
        in_specs.append(_const_block_spec((Kp, Cout), const_mode))
        operands.append(labels_p)
        kern = functools.partial(_snn_kernel_soft, mask_padded=mask_padded)

    return pl.pallas_call(
        kern,
        out_shape=jax.ShapeDtypeStruct((Np, Cout), jnp.float32),
        grid=(Np // tm,),
        in_specs=in_specs,
        out_specs=pl.BlockSpec((tm, Cout), lambda i: (i, 0)),
        compiler_params=pltpu.CompilerParams(
            dimension_semantics=("parallel",),
            vmem_limit_bytes=vmem_limit),
    )(*operands)


# ---------------------------------------------------------------------------
# Kernel 2: view-tiled sharpen + sinkhorn + CE loss + me-max + logging stats
# ---------------------------------------------------------------------------
def _loss_kernel(pv_ref, traw_ref, tgt_ref, scal_ref,
                 tgt_sc, ce_sc, colsum_sc, *,
                 T, num_itr, use_sinkhorn, c_real, b_real, n_views,
                 compute_stats):
    v = pl.program_id(0)
    Bp, Cp = tgt_sc.shape
    col = jax.lax.broadcasted_iota(jnp.int32, (Bp, Cp), 1)
    col_valid = col < c_real
    has_row_pad = b_real < Bp
    if has_row_pad:
        row_valid = jax.lax.broadcasted_iota(jnp.int32, (Bp, Cp), 0) < b_real

    # --- first view: sharpen + (single-device) sinkhorn on target probs ----
    @pl.when(v == 0)
    def _init():
        t0 = traw_ref[...]                                   # (Bp, Cp)
        inv_T = 1.0 / T
        n_int = int(round(inv_T))
        if abs(inv_T - n_int) < 1e-6 and n_int >= 1:
            sp = t0
            for _ in range(n_int - 1):                       # integer power
                sp = sp * t0
        else:
            sp = jnp.where(t0 > 0.0,
                           jnp.exp(inv_T * jnp.log(jnp.maximum(t0, 1e-38))),
                           0.0)
        sp = jnp.where(col_valid, sp, 0.0)                   # padded cols -> 0
        if has_row_pad:
            sp = jnp.where(row_valid, sp, 0.0)               # padded rows -> 0
        # exact divisions below (tiny data; avoid approx-reciprocal drift)
        sp = sp / jnp.maximum(jnp.sum(sp, axis=1, keepdims=True), 1e-30)

        if use_sinkhorn:
            # S[i, j] = Q[j, i] of the reference (Q = targets.T), so
            # Q row-sums == column sums of S, Q col-sums == row sums of S.
            S = sp
            total = jnp.sum(jnp.sum(S, axis=1, keepdims=True), axis=0,
                            keepdims=True)
            S = S / jnp.maximum(total, 1e-30)
            for _ in range(num_itr):
                r = jnp.sum(S, axis=0, keepdims=True)        # (1, Cp)
                S = S / jnp.where(r > 0.0, r, 1.0) * (1.0 / float(c_real))
                c = jnp.sum(S, axis=1, keepdims=True)        # (Bp, 1)
                S = S / jnp.maximum(c, 1e-30) * (1.0 / float(b_real))
            targets = S * float(b_real)
        else:
            targets = sp
        tgt_sc[...] = targets
        ce_sc[...] = jnp.zeros_like(ce_sc)
        colsum_sc[...] = jnp.zeros_like(colsum_sc)

    # --- every view: accumulate CE and me-max partial sums -----------------
    p = pv_ref[...]                                          # (Bp, Cp)
    t = tgt_sc[...]
    logp = jnp.log(jnp.maximum(p, 1e-30))
    ce_sc[...] += jnp.sum(-t * logp, axis=0, keepdims=True)  # (1, Cp)
    pm = jnp.where(row_valid, p, 0.0) if has_row_pad else p
    colsum_sc[...] += jnp.sum(pm, axis=0, keepdims=True)     # (1, Cp)

    # --- last view: finalize loss, regularizer and logging stats -----------
    @pl.when(v == n_views - 1)
    def _fin():
        denom = 1.0 / float(n_views * b_real)
        loss = jnp.sum(ce_sc[...], axis=1, keepdims=True) * denom     # (1, 1)
        avg = colsum_sc[...] * denom                                   # (1, Cp)
        rloss = (jnp.sum(avg * jnp.log(jnp.maximum(avg, 1e-30)),
                         axis=1, keepdims=True) + math.log(float(c_real)))

        tg = tgt_sc[...]
        tgt_ref[...] = tg
        if compute_stats:
            t_neg = jnp.where(col_valid, tg, -1e30)
            t_pos = jnp.where(col_valid, tg, 1e30)
            row_max = jnp.max(t_neg, axis=1, keepdims=True)            # (Bp, 1)
            row_min = jnp.min(t_pos, axis=1, keepdims=True)
            if has_row_pad:
                rv = jax.lax.broadcasted_iota(jnp.int32, (Bp, 1), 0) < b_real
                max_t = jnp.sum(jnp.where(rv, row_max, 0.0), axis=0,
                                keepdims=True) * (1.0 / float(b_real))
                min_t = jnp.sum(jnp.where(rv, row_min, 0.0), axis=0,
                                keepdims=True) * (1.0 / float(b_real))
            else:
                max_t = jnp.mean(row_max, axis=0, keepdims=True)
                min_t = jnp.mean(row_min, axis=0, keepdims=True)
            # distinct argmax classes (first max per row, as torch.argmax)
            first_col = jnp.min(jnp.where(t_neg >= row_max, col, Cp),
                                axis=1, keepdims=True)                 # (Bp, 1)
            hit = col == first_col
            if has_row_pad:
                hit = jnp.logical_and(hit, row_valid)
            class_hit = jnp.max(hit.astype(jnp.float32), axis=0, keepdims=True)
            num_ps = jnp.sum(class_hit, axis=1, keepdims=True)         # (1, 1)
        else:
            max_t = jnp.zeros((1, 1), jnp.float32)
            min_t = jnp.zeros((1, 1), jnp.float32)
            num_ps = jnp.zeros((1, 1), jnp.float32)

        # pack all scalars into one lane-dense (1, 128) output
        lane = jax.lax.broadcasted_iota(jnp.int32, (1, 128), 1)
        zeros = jnp.zeros((1, 128), jnp.float32)
        out = jnp.where(lane == 0, loss, zeros)
        out = out + jnp.where(lane == 1, rloss, zeros)
        out = out + jnp.where(lane == 2, max_t, zeros)
        out = out + jnp.where(lane == 3, min_t, zeros)
        out = out + jnp.where(lane == 4, num_ps, zeros)
        scal_ref[...] = out


def sharpen_sinkhorn_loss(probs_pad, *, Bp, b_real, n_views, tgt_block,
                          T, num_itr, use_sinkhorn, c_real, compute_stats):
    """probs_pad: padded (Np, Cp) kernel-1 output; rows [v*Bp, (v+1)*Bp) hold
    anchor view v (v < n_views) and rows [tgt_block*Bp, ...) hold the target
    probabilities.  No HBM slicing happens on the way in."""
    Cp = probs_pad.shape[1]
    cap = _vmem_capacity_bytes()
    budget = (cap * 3) // 4
    est = (4 * Bp * Cp * 4             # view block + target block, double-buffered
           + 2 * Bp * Cp * 4           # targets output
           + Bp * Cp * 4 + 2 * Cp * 4  # scratch
           + 6 * Bp * Cp * 4)          # sharpen/sinkhorn live temps at v == 0
    vmem_limit = int(min(budget, max(32 * 2**20, 2 * est)))

    return pl.pallas_call(
        functools.partial(_loss_kernel, T=T, num_itr=num_itr,
                          use_sinkhorn=use_sinkhorn, c_real=c_real,
                          b_real=b_real, n_views=n_views,
                          compute_stats=compute_stats),
        out_shape=(jax.ShapeDtypeStruct((Bp, Cp), jnp.float32),
                   jax.ShapeDtypeStruct((1, 128), jnp.float32)),
        grid=(n_views,),
        in_specs=[pl.BlockSpec((Bp, Cp), lambda v: (v, 0)),
                  pl.BlockSpec((Bp, Cp), lambda v: (tgt_block, 0))],
        out_specs=(pl.BlockSpec((Bp, Cp), lambda v: (0, 0)),
                   pl.BlockSpec((1, 128), lambda v: (0, 0))),
        scratch_shapes=[pltpu.VMEM((Bp, Cp), jnp.float32),   # targets
                        pltpu.VMEM((1, Cp), jnp.float32),    # CE column sums
                        pltpu.VMEM((1, Cp), jnp.float32)],   # prob column sums
        compiler_params=pltpu.CompilerParams(
            dimension_semantics=("arbitrary",),
            vmem_limit_bytes=vmem_limit),
    )(probs_pad, probs_pad)


# ---------------------------------------------------------------------------
# Forward (mirrors SDPNLoss.forward)
# ---------------------------------------------------------------------------
def sdpn_loss_forward(anchor_views, target_views, prototypes, proto_labels,
                      tau=0.1, T=0.25, use_sinkhorn=True, me_max=True,
                      num_itr=3, n_views=4, labels_identity=False,
                      compute_stats=True, tile_targets=False, tm_max=None):
    A, D = anchor_views.shape
    B, D2 = target_views.shape
    K, C = proto_labels.shape
    assert D == D2 and prototypes.shape == (K, D)
    assert A == n_views * B, "anchor_views must stack n_views blocks of B rows"
    if labels_identity:
        assert K == C, "identity-label fast path needs labels == I_K"

    Dp = _round_up(D, 128)
    Kp = _round_up(K, 128)
    Cp = _round_up(C, 128)
    Bp = _round_up(B, 8)

    # Hoisted prototype prep (once): L2-normalize, fold 1/tau, pad, transpose,
    # bf16-cast.  The kernel never touches tau or un-normalized prototypes.
    p32 = prototypes.astype(jnp.float32)
    pn = p32 * jax.lax.rsqrt(
        jnp.maximum(jnp.sum(p32 * p32, axis=1, keepdims=True), 1e-24))
    pn_t = jnp.pad(pn * (1.0 / tau),
                   ((0, Kp - K), (0, Dp - D))).T.astype(jnp.bfloat16)
    # Additive bias masking padded prototype columns out of the softmax.
    kbias = jnp.where(jnp.arange(Kp, dtype=jnp.int32)[None, :] < K,
                      0.0, -1e30).astype(jnp.float32)
    labels_p = None
    if not labels_identity:
        labels_p = jnp.pad(proto_labels.astype(jnp.float32),
                           ((0, Kp - K), (0, Cp - C)))

    # Stack queries as (n_views + 1) row blocks of Bp rows each so kernel 2
    # can address anchor views and the target block directly (no HBM slices).
    if Bp == B:
        q_all = jnp.concatenate([anchor_views, target_views], axis=0)
    else:
        a = jnp.pad(anchor_views.reshape(n_views, B, D),
                    ((0, 0), (0, Bp - B), (0, 0))).reshape(n_views * Bp, D)
        t = jnp.pad(target_views, ((0, Bp - B), (0, 0)))
        q_all = jnp.concatenate([a, t], axis=0)

    # Kernel 1: SNN probabilities for all anchor + target rows (padded out).
    probs_pad = snn_fused(q_all, pn_t, kbias, labels_p,
                          mask_padded=(K < Kp), tm_max=tm_max)

    # Kernel 2: sharpen + sinkhorn + CE + me-max + stats, view-tiled.
    targets_pad, scalars = sharpen_sinkhorn_loss(
        probs_pad, Bp=Bp, b_real=B, n_views=n_views, tgt_block=n_views,
        T=T, num_itr=num_itr, use_sinkhorn=use_sinkhorn, c_real=C,
        compute_stats=compute_stats)

    loss = scalars[0, 0]
    rloss = scalars[0, 1] if me_max else jnp.float32(0.0)
    log_dct = {'np': scalars[0, 4], 'max_t': scalars[0, 2],
               'min_t': scalars[0, 3]}          # device scalars, no host sync
    targets = targets_pad[:B, :C]
    if tile_targets:
        # matches the reference's torch.cat([targets] * 4, dim=0)
        targets = jnp.tile(targets, (n_views, 1))
    return loss, rloss, log_dct, targets


if __name__ == "__main__":
    key = jax.random.PRNGKey(0)
    k1, k2, k3 = jax.random.split(key, 3)
    B, D, K = 8, 32, 64          # target batch, feature dim, #prototypes(=classes)
    target_views = jax.random.normal(k1, (B, D), dtype=jnp.float32)
    anchor_views = jax.random.normal(k2, (4 * B, D), dtype=jnp.float32)
    prototypes = jax.random.normal(k3, (K, D), dtype=jnp.float32)
    proto_labels = jnp.eye(K, dtype=jnp.float32)   # one-hot prototype labels

    # general soft-label path (runs the f32 label matmul)
    fwd = jax.jit(functools.partial(sdpn_loss_forward, tau=0.1, T=0.25,
                                    use_sinkhorn=True, me_max=True))
    out_general = fwd(anchor_views, target_views, prototypes, proto_labels)

    # fast path: labels are exactly I_K, so the second matmul is skipped
    fwd_id = jax.jit(functools.partial(sdpn_loss_forward, tau=0.1, T=0.25,
                                       use_sinkhorn=True, me_max=True,
                                       labels_identity=True))
    out_identity = fwd_id(anchor_views, target_views, prototypes, proto_labels)

    jax.block_until_ready((out_general, out_identity))
    print("KERNEL_OK")
</pallas_src>

<mosaic_0001>
module attributes {stable_mosaic.version = 11 : i64} {
  func.func @_snn_kernel_soft(%arg0: i32, %arg1: memref<24x128xbf16, #tpu.memory_space<vmem>>, %arg2: memref<128x128xbf16, #tpu.memory_space<vmem>>, %arg3: memref<1x128xf32, #tpu.memory_space<vmem>>, %arg4: memref<128x128xf32, #tpu.memory_space<vmem>>, %arg5: memref<24x128xf32, #tpu.memory_space<vmem>>) attributes {dimension_semantics = [#tpu.dimension_semantics<parallel>], iteration_bounds = array<i64: 2>, scalar_prefetch = 0 : i64, scratch_operands = 0 : i64, tpu.core_type = #tpu.core_type<tc>, window_params = [{transform_indices = @transform_0, window_bounds = array<i64: 24, 128>}, {pipeline_mode = #tpu.pipeline_mode<synchronous>, transform_indices = @transform_1, window_bounds = array<i64: 128, 128>}, {pipeline_mode = #tpu.pipeline_mode<synchronous>, transform_indices = @transform_2, window_bounds = array<i64: 1, 128>}, {pipeline_mode = #tpu.pipeline_mode<synchronous>, transform_indices = @transform_3, window_bounds = array<i64: 128, 128>}, {transform_indices = @transform_4, window_bounds = array<i64: 24, 128>}]} {
    %c0 = arith.constant 0 : index
    %c0_0 = arith.constant 0 : index
    %0 = vector.load %arg1[%c0, %c0_0] : memref<24x128xbf16, #tpu.memory_space<vmem>>, vector<24x128xbf16>
    %1 = arith.extf %0 : vector<24x128xbf16> to vector<24x128xf32>
    %2 = arith.mulf %1, %1 : vector<24x128xf32>
    %cst = arith.constant dense<0.000000e+00> : vector<24xf32>
    %3 = vector.multi_reduction <add>, %2, %cst [1] : vector<24x128xf32> to vector<24xf32>
    %4 = vector.shape_cast %3 : vector<24xf32> to vector<24x1xf32>
    %cst_1 = arith.constant 1.000000e-24 : f32
    %5 = vector.broadcast %cst_1 : f32 to vector<24x1xf32>
    %6 = arith.maximumf %4, %5 : vector<24x1xf32>
    %7 = math.rsqrt %6 : vector<24x1xf32>
    %8 = vector.broadcast %7 : vector<24x1xf32> to vector<24x128xf32>
    %9 = arith.mulf %1, %8 : vector<24x128xf32>
    %10 = arith.truncf %9 : vector<24x128xf32> to vector<24x128xbf16>
    %c0_2 = arith.constant 0 : index
    %c0_3 = arith.constant 0 : index
    %11 = vector.load %arg2[%c0_2, %c0_3] : memref<128x128xbf16, #tpu.memory_space<vmem>>, vector<128x128xbf16>
    %cst_4 = arith.constant dense<0.000000e+00> : vector<24x128xf32>
    %12 = tpu.matmul %10, %11, %cst_4 {dimension_numbers = #tpu.dot_dimension_numbers<[1], [0], [0], [1], [0, 0, 1, 1], [], []>} : vector<24x128xbf16>, vector<128x128xbf16>, vector<24x128xf32> -> vector<24x128xf32>
    %c0_5 = arith.constant 0 : index
    %c0_6 = arith.constant 0 : index
    %13 = vector.load %arg3[%c0_5, %c0_6] : memref<1x128xf32, #tpu.memory_space<vmem>>, vector<1x128xf32>
    %14 = vector.broadcast %13 : vector<1x128xf32> to vector<24x128xf32>
    %15 = arith.addf %12, %14 : vector<24x128xf32>
    %cst_7 = arith.constant dense<0xFF800000> : vector<24xf32>
    %16 = vector.multi_reduction <maximumf>, %15, %cst_7 [1] : vector<24x128xf32> to vector<24xf32>
    %17 = vector.shape_cast %16 : vector<24xf32> to vector<24x1xf32>
    %18 = vector.broadcast %17 : vector<24x1xf32> to vector<24x128xf32>
    %19 = arith.subf %15, %18 : vector<24x128xf32>
    %20 = math.exp %19 : vector<24x128xf32>
    %cst_8 = arith.constant dense<0.000000e+00> : vector<24xf32>
    %21 = vector.multi_reduction <add>, %20, %cst_8 [1] : vector<24x128xf32> to vector<24xf32>
    %22 = vector.shape_cast %21 : vector<24xf32> to vector<24x1xf32>
    %23 = tpu.reciprocal %22 {approx = true} : vector<24x1xf32> -> vector<24x1xf32>
    %24 = vector.broadcast %23 : vector<24x1xf32> to vector<24x128xf32>
    %25 = arith.mulf %20, %24 : vector<24x128xf32>
    %c0_9 = arith.constant 0 : index
    %c0_10 = arith.constant 0 : index
    %26 = vector.load %arg4[%c0_9, %c0_10] : memref<128x128xf32, #tpu.memory_space<vmem>>, vector<128x128xf32>
    %cst_11 = arith.constant dense<0.000000e+00> : vector<24x128xf32>
    %27 = tpu.matmul %25, %26, %cst_11 {dimension_numbers = #tpu.dot_dimension_numbers<[1], [0], [0], [1], [0, 0, 1, 1], [], []>} : vector<24x128xf32>, vector<128x128xf32>, vector<24x128xf32> -> vector<24x128xf32>
    %c0_12 = arith.constant 0 : index
    %c0_13 = arith.constant 0 : index
    %28 = vector.load %arg5[%c0_12, %c0_13] : memref<24x128xf32, #tpu.memory_space<vmem>>, vector<24x128xf32>
    tpu.vector_store %arg5[%c0_12, %c0_13], %27 {strides = array<i32>} : memref<24x128xf32, #tpu.memory_space<vmem>>, vector<24x128xf32>,
    return
  }
  func.func @transform_0(%arg0: i32) -> (i32, i32) {
    %c0_i32 = arith.constant 0 : i32
    %c0_i32_0 = arith.constant 0 : i32
    return %arg0, %c0_i32 : i32, i32
  }
  func.func @transform_1(%arg0: i32) -> (i32, i32) {
    %c0_i32 = arith.constant 0 : i32
    %c0_i32_0 = arith.constant 0 : i32
    %c0_i32_1 = arith.constant 0 : i32
    return %c0_i32, %c0_i32_0 : i32, i32
  }
  func.func @transform_2(%arg0: i32) -> (i32, i32) {
    %c0_i32 = arith.constant 0 : i32
    %c0_i32_0 = arith.constant 0 : i32
    %c0_i32_1 = arith.constant 0 : i32
    return %c0_i32, %c0_i32_0 : i32, i32
  }
  func.func @transform_3(%arg0: i32) -> (i32, i32) {
    %c0_i32 = arith.constant 0 : i32
    %c0_i32_0 = arith.constant 0 : i32
    %c0_i32_1 = arith.constant 0 : i32
    return %c0_i32, %c0_i32_0 : i32, i32
  }
  func.func @transform_4(%arg0: i32) -> (i32, i32) {
    %c0_i32 = arith.constant 0 : i32
    %c0_i32_0 = arith.constant 0 : i32
    return %arg0, %c0_i32 : i32, i32
  }
}

module attributes {stable_mosaic.version = 11 : i64} {
  func.func @_loss_kernel(%arg0: i32, %arg1: memref<8x128xf32, #tpu.memory_space<vmem>>, %arg2: memref<8x128xf32, #tpu.memory_space<vmem>>, %arg3: memref<8x128xf32, #tpu.memory_space<vmem>>, %arg4: memref<1x128xf32, #tpu.memory_space<vmem>>, %arg5: memref<8x128xf32, #tpu.memory_space<vmem>>, %arg6: memref<1x128xf32, #tpu.memory_space<vmem>>, %arg7: memref<1x128xf32, #tpu.memory_space<vmem>>) attributes {dimension_semantics = [#tpu.dimension_semantics<arbitrary>], iteration_bounds = array<i64: 4>, scalar_prefetch = 0 : i64, scratch_operands = 3 : i64, tpu.core_type = #tpu.core_type<tc>, window_params = [{transform_indices = @transform_0, window_bounds = array<i64: 8, 128>}, {transform_indices = @transform_1, window_bounds = array<i64: 8, 128>}, {pipeline_mode = #tpu.pipeline_mode<synchronous>, transform_indices = @transform_2, window_bounds = array<i64: 8, 128>}, {pipeline_mode = #tpu.pipeline_mode<synchronous>, transform_indices = @transform_3, window_bounds = array<i64: 1, 128>}]} {
    %0 = tpu.iota {dimensions = array<i32: 1>} : vector<8x128xi32>
    %c64_i32 = arith.constant 64 : i32
    %1 = vector.broadcast %c64_i32 : i32 to vector<8x128xi32>
    %2 = arith.cmpi slt, %0, %1 : vector<8x128xi32>
    %c0_i32 = arith.constant 0 : i32
    %3 = arith.cmpi eq, %arg0, %c0_i32 : i32
    %4 = arith.extui %3 : i1 to i32
    %c0_i32_0 = arith.constant 0 : i32
    %5 = arith.cmpi ne, %4, %c0_i32_0 : i32
    scf.if %5 {
      %c0_16 = arith.constant 0 : index
      %c0_17 = arith.constant 0 : index
      %27 = vector.load %arg2[%c0_16, %c0_17] : memref<8x128xf32, #tpu.memory_space<vmem>>, vector<8x128xf32>
      %28 = arith.mulf %27, %27 : vector<8x128xf32>
      %29 = arith.mulf %28, %27 : vector<8x128xf32>
      %30 = arith.mulf %29, %27 : vector<8x128xf32>
      %cst_18 = arith.constant 0.000000e+00 : f32
      %31 = vector.broadcast %cst_18 : f32 to vector<8x128xf32>
      %32 = arith.select %2, %30, %31 : vector<8x128xi1>, vector<8x128xf32>
      %cst_19 = arith.constant dense<0.000000e+00> : vector<8xf32>
      %33 = vector.multi_reduction <add>, %32, %cst_19 [1] : vector<8x128xf32> to vector<8xf32>
      %34 = vector.shape_cast %33 : vector<8xf32> to vector<8x1xf32>
      %cst_20 = arith.constant 1.000000e-30 : f32
      %35 = vector.broadcast %cst_20 : f32 to vector<8x1xf32>
      %36 = arith.maximumf %34, %35 : vector<8x1xf32>
      %37 = vector.broadcast %36 : vector<8x1xf32> to vector<8x128xf32>
      %38 = arith.divf %32, %37 : vector<8x128xf32>
      %cst_21 = arith.constant dense<0.000000e+00> : vector<8xf32>
      %39 = vector.multi_reduction <add>, %38, %cst_21 [1] : vector<8x128xf32> to vector<8xf32>
      %40 = vector.shape_cast %39 : vector<8xf32> to vector<8x1xf32>
      %cst_22 = arith.constant dense<0.000000e+00> : vector<1xf32>
      %41 = vector.multi_reduction <add>, %40, %cst_22 [0] : vector<8x1xf32> to vector<1xf32>
      %42 = vector.shape_cast %41 : vector<1xf32> to vector<1x1xf32>
      %cst_23 = arith.constant 1.000000e-30 : f32
      %43 = vector.broadcast %cst_23 : f32 to vector<1x1xf32>
      %44 = arith.maximumf %42, %43 : vector<1x1xf32>
      %45 = vector.broadcast %44 : vector<1x1xf32> to vector<8x128xf32>
      %46 = arith.divf %38, %45 : vector<8x128xf32>
      %cst_24 = arith.constant dense<0.000000e+00> : vector<128xf32>
      %47 = vector.multi_reduction <add>, %46, %cst_24 [0] : vector<8x128xf32> to vector<128xf32>
      %48 = vector.shape_cast %47 : vector<128xf32> to vector<1x128xf32>
      %cst_25 = arith.constant 0.000000e+00 : f32
      %49 = vector.broadcast %cst_25 : f32 to vector<1x128xf32>
      %50 = arith.cmpf ogt, %48, %49 : vector<1x128xf32>
      %cst_26 = arith.constant 1.000000e+00 : f32
      %51 = vector.broadcast %cst_26 : f32 to vector<1x128xf32>
      %52 = arith.select %50, %48, %51 : vector<1x128xi1>, vector<1x128xf32>
      %53 = vector.broadcast %52 : vector<1x128xf32> to vector<8x128xf32>
      %54 = arith.divf %46, %53 : vector<8x128xf32>
      %cst_27 = arith.constant 1.562500e-02 : f32
      %55 = vector.broadcast %cst_27 : f32 to vector<8x128xf32>
      %56 = arith.mulf %54, %55 : vector<8x128xf32>
      %cst_28 = arith.constant dense<0.000000e+00> : vector<8xf32>
      %57 = vector.multi_reduction <add>, %56, %cst_28 [1] : vector<8x128xf32> to vector<8xf32>
      %58 = vector.shape_cast %57 : vector<8xf32> to vector<8x1xf32>
      %cst_29 = arith.constant 1.000000e-30 : f32
      %59 = vector.broadcast %cst_29 : f32 to vector<8x1xf32>
      %60 = arith.maximumf %58, %59 : vector<8x1xf32>
      %61 = vector.broadcast %60 : vector<8x1xf32> to vector<8x128xf32>
      %62 = arith.divf %56, %61 : vector<8x128xf32>
      %cst_30 = arith.constant 1.250000e-01 : f32
      %63 = vector.broadcast %cst_30 : f32 to vector<8x128xf32>
      %64 = arith.mulf %62, %63 : vector<8x128xf32>
      %cst_31 = arith.constant dense<0.000000e+00> : vector<128xf32>
      %65 = vector.multi_reduction <add>, %64, %cst_31 [0] : vector<8x128xf32> to vector<128xf32>
      %66 = vector.shape_cast %65 : vector<128xf32> to vector<1x128xf32>
      %cst_32 = arith.constant 0.000000e+00 : f32
      %67 = vector.broadcast %cst_32 : f32 to vector<1x128xf32>
      %68 = arith.cmpf ogt, %66, %67 : vector<1x128xf32>
      %cst_33 = arith.constant 1.000000e+00 : f32
      %69 = vector.broadcast %cst_33 : f32 to vector<1x128xf32>
      %70 = arith.select %68, %66, %69 : vector<1x128xi1>, vector<1x128xf32>
      %71 = vector.broadcast %70 : vector<1x128xf32> to vector<8x128xf32>
      %72 = arith.divf %64, %71 : vector<8x128xf32>
      %cst_34 = arith.constant 1.562500e-02 : f32
      %73 = vector.broadcast %cst_34 : f32 to vector<8x128xf32>
      %74 = arith.mulf %72, %73 : vector<8x128xf32>
      %cst_35 = arith.constant dense<0.000000e+00> : vector<8xf32>
      %75 = vector.multi_reduction <add>, %74, %cst_35 [1] : vector<8x128xf32> to vector<8xf32>
      %76 = vector.shape_cast %75 : vector<8xf32> to vector<8x1xf32>
      %cst_36 = arith.constant 1.000000e-30 : f32
      %77 = vector.broadcast %cst_36 : f32 to vector<8x1xf32>
      %78 = arith.maximumf %76, %77 : vector<8x1xf32>
      %79 = vector.broadcast %78 : vector<8x1xf32> to vector<8x128xf32>
      %80 = arith.divf %74, %79 : vector<8x128xf32>
      %cst_37 = arith.constant 1.250000e-01 : f32
      %81 = vector.broadcast %cst_37 : f32 to vector<8x128xf32>
      %82 = arith.mulf %80, %81 : vector<8x128xf32>
      %cst_38 = arith.constant dense<0.000000e+00> : vector<128xf32>
      %83 = vector.multi_reduction <add>, %82, %cst_38 [0] : vector<8x128xf32> to vector<128xf32>
      %84 = vector.shape_cast %83 : vector<128xf32> to vector<1x128xf32>
      %cst_39 = arith.constant 0.000000e+00 : f32
      %85 = vector.broadcast %cst_39 : f32 to vector<1x128xf32>
      %86 = arith.cmpf ogt, %84, %85 : vector<1x128xf32>
      %cst_40 = arith.constant 1.000000e+00 : f32
      %87 = vector.broadcast %cst_40 : f32 to vector<1x128xf32>
      %88 = arith.select %86, %84, %87 : vector<1x128xi1>, vector<1x128xf32>
      %89 = vector.broadcast %88 : vector<1x128xf32> to vector<8x128xf32>
      %90 = arith.divf %82, %89 : vector<8x128xf32>
      %cst_41 = arith.constant 1.562500e-02 : f32
      %91 = vector.broadcast %cst_41 : f32 to vector<8x128xf32>
      %92 = arith.mulf %90, %91 : vector<8x128xf32>
      %cst_42 = arith.constant dense<0.000000e+00> : vector<8xf32>
      %93 = vector.multi_reduction <add>, %92, %cst_42 [1] : vector<8x128xf32> to vector<8xf32>
      %94 = vector.shape_cast %93 : vector<8xf32> to vector<8x1xf32>
      %cst_43 = arith.constant 1.000000e-30 : f32
      %95 = vector.broadcast %cst_43 : f32 to vector<8x1xf32>
      %96 = arith.maximumf %94, %95 : vector<8x1xf32>
      %97 = vector.broadcast %96 : vector<8x1xf32> to vector<8x128xf32>
      %98 = arith.divf %92, %97 : vector<8x128xf32>
      %cst_44 = arith.constant 1.250000e-01 : f32
      %99 = vector.broadcast %cst_44 : f32 to vector<8x128xf32>
      %100 = arith.mulf %98, %99 : vector<8x128xf32>
      %cst_45 = arith.constant 8.000000e+00 : f32
      %101 = vector.broadcast %cst_45 : f32 to vector<8x128xf32>
      %102 = arith.mulf %100, %101 : vector<8x128xf32>
      %c0_46 = arith.constant 0 : index
      %c0_47 = arith.constant 0 : index
      %103 = vector.load %arg5[%c0_46, %c0_47] : memref<8x128xf32, #tpu.memory_space<vmem>>, vector<8x128xf32>
      tpu.vector_store %arg5[%c0_46, %c0_47], %102 {strides = array<i32>} : memref<8x128xf32, #tpu.memory_space<vmem>>, vector<8x128xf32>,
      %cst_48 = arith.constant 0.000000e+00 : f32
      %104 = vector.broadcast %cst_48 : f32 to vector<1x128xf32>
      %c0_49 = arith.constant 0 : index
      %c0_50 = arith.constant 0 : index
      %105 = vector.load %arg6[%c0_49, %c0_50] : memref<1x128xf32, #tpu.memory_space<vmem>>, vector<1x128xf32>
      tpu.vector_store %arg6[%c0_49, %c0_50], %104 {strides = array<i32>} : memref<1x128xf32, #tpu.memory_space<vmem>>, vector<1x128xf32>,
      %cst_51 = arith.constant 0.000000e+00 : f32
      %106 = vector.broadcast %cst_51 : f32 to vector<1x128xf32>
      %c0_52 = arith.constant 0 : index
      %c0_53 = arith.constant 0 : index
      %107 = vector.load %arg7[%c0_52, %c0_53] : memref<1x128xf32, #tpu.memory_space<vmem>>, vector<1x128xf32>
      tpu.vector_store %arg7[%c0_52, %c0_53], %106 {strides = array<i32>} : memref<1x128xf32, #tpu.memory_space<vmem>>, vector<1x128xf32>,
    } else {
    }
    %c0 = arith.constant 0 : index
    %c0_1 = arith.constant 0 : index
    %6 = vector.load %arg1[%c0, %c0_1] : memref<8x128xf32, #tpu.memory_space<vmem>>, vector<8x128xf32>
    %c0_2 = arith.constant 0 : index
    %c0_3 = arith.constant 0 : index
    %7 = vector.load %arg5[%c0_2, %c0_3] : memref<8x128xf32, #tpu.memory_space<vmem>>, vector<8x128xf32>
    %cst = arith.constant 1.000000e-30 : f32
    %8 = vector.broadcast %cst : f32 to vector<8x128xf32>
    %9 = arith.maximumf %6, %8 : vector<8x128xf32>
    %10 = math.log %9 : vector<8x128xf32>
    %c0_4 = arith.constant 0 : index
    %c0_5 = arith.constant 0 : index
    %11 = vector.load %arg6[%c0_4, %c0_5] : memref<1x128xf32, #tpu.memory_space<vmem>>, vector<1x128xf32>
    %cst_6 = arith.constant 0.000000e+00 : f32
    %12 = vector.broadcast %cst_6 : f32 to vector<8x128xf32>
    %13 = arith.subf %12, %7 : vector<8x128xf32>
    %14 = arith.mulf %13, %10 : vector<8x128xf32>
    %cst_7 = arith.constant dense<0.000000e+00> : vector<128xf32>
    %15 = vector.multi_reduction <add>, %14, %cst_7 [0] : vector<8x128xf32> to vector<128xf32>
    %16 = vector.shape_cast %15 : vector<128xf32> to vector<1x128xf32>
    %17 = arith.addf %11, %16 : vector<1x128xf32>
    %c0_8 = arith.constant 0 : index
    %c0_9 = arith.constant 0 : index
    %18 = vector.load %arg6[%c0_8, %c0_9] : memref<1x128xf32, #tpu.memory_space<vmem>>, vector<1x128xf32>
    tpu.vector_store %arg6[%c0_8, %c0_9], %17 {strides = array<i32>} : memref<1x128xf32, #tpu.memory_space<vmem>>, vector<1x128xf32>,
    %c0_10 = arith.constant 0 : index
    %c0_11 = arith.constant 0 : index
    %19 = vector.load %arg7[%c0_10, %c0_11] : memref<1x128xf32, #tpu.memory_space<vmem>>, vector<1x128xf32>
    %cst_12 = arith.constant dense<0.000000e+00> : vector<128xf32>
    %20 = vector.multi_reduction <add>, %6, %cst_12 [0] : vector<8x128xf32> to vector<128xf32>
    %21 = vector.shape_cast %20 : vector<128xf32> to vector<1x128xf32>
    %22 = arith.addf %19, %21 : vector<1x128xf32>
    %c0_13 = arith.constant 0 : index
    %c0_14 = arith.constant 0 : index
    %23 = vector.load %arg7[%c0_13, %c0_14] : memref<1x128xf32, #tpu.memory_space<vmem>>, vector<1x128xf32>
    tpu.vector_store %arg7[%c0_13, %c0_14], %22 {strides = array<i32>} : memref<1x128xf32, #tpu.memory_space<vmem>>, vector<1x128xf32>,
    %c3_i32 = arith.constant 3 : i32
    %24 = arith.cmpi eq, %arg0, %c3_i32 : i32
    %25 = arith.extui %24 : i1 to i32
    %c0_i32_15 = arith.constant 0 : i32
    %26 = arith.cmpi ne, %25, %c0_i32_15 : i32
    scf.if %26 {
      %c0_16 = arith.constant 0 : index
      %c0_17 = arith.constant 0 : index
      %27 = vector.load %arg6[%c0_16, %c0_17] : memref<1x128xf32, #tpu.memory_space<vmem>>, vector<1x128xf32>
      %cst_18 = arith.constant dense<0.000000e+00> : vector<1xf32>
      %28 = vector.multi_reduction <add>, %27, %cst_18 [1] : vector<1x128xf32> to vector<1xf32>
      %29 = vector.shape_cast %28 : vector<1xf32> to vector<1x1xf32>
      %cst_19 = arith.constant 3.125000e-02 : f32
      %30 = vector.broadcast %cst_19 : f32 to vector<1x1xf32>
      %31 = arith.mulf %29, %30 : vector<1x1xf32>
      %c0_20 = arith.constant 0 : index
      %c0_21 = arith.constant 0 : index
      %32 = vector.load %arg7[%c0_20, %c0_21] : memref<1x128xf32, #tpu.memory_space<vmem>>, vector<1x128xf32>
      %cst_22 = arith.constant 3.125000e-02 : f32
      %33 = vector.broadcast %cst_22 : f32 to vector<1x128xf32>
      %34 = arith.mulf %32, %33 : vector<1x128xf32>
      %cst_23 = arith.constant 1.000000e-30 : f32
      %35 = vector.broadcast %cst_23 : f32 to vector<1x128xf32>
      %36 = arith.maximumf %34, %35 : vector<1x128xf32>
      %37 = math.log %36 : vector<1x128xf32>
      %38 = arith.mulf %34, %37 : vector<1x128xf32>
      %cst_24 = arith.constant dense<0.000000e+00> : vector<1xf32>
      %39 = vector.multi_reduction <add>, %38, %cst_24 [1] : vector<1x128xf32> to vector<1xf32>
      %40 = vector.shape_cast %39 : vector<1xf32> to vector<1x1xf32>
      %cst_25 = arith.constant 4.15888309 : f32
      %41 = vector.broadcast %cst_25 : f32 to vector<1x1xf32>
      %42 = arith.addf %40, %41 : vector<1x1xf32>
      %c0_26 = arith.constant 0 : index
      %c0_27 = arith.constant 0 : index
      %43 = vector.load %arg5[%c0_26, %c0_27] : memref<8x128xf32, #tpu.memory_space<vmem>>, vector<8x128xf32>
      %c0_28 = arith.constant 0 : index
      %c0_29 = arith.constant 0 : index
      %44 = vector.load %arg3[%c0_28, %c0_29] : memref<8x128xf32, #tpu.memory_space<vmem>>, vector<8x128xf32>
      tpu.vector_store %arg3[%c0_28, %c0_29], %43 {strides = array<i32>} : memref<8x128xf32, #tpu.memory_space<vmem>>, vector<8x128xf32>,
      %cst_30 = arith.constant -1.000000e+30 : f32
      %45 = vector.broadcast %cst_30 : f32 to vector<8x128xf32>
      %46 = arith.select %2, %43, %45 : vector<8x128xi1>, vector<8x128xf32>
      %cst_31 = arith.constant 1.000000e+30 : f32
      %47 = vector.broadcast %cst_31 : f32 to vector<8x128xf32>
      %48 = arith.select %2, %43, %47 : vector<8x128xi1>, vector<8x128xf32>
      %cst_32 = arith.constant dense<0xFF800000> : vector<8xf32>
      %49 = vector.multi_reduction <maximumf>, %46, %cst_32 [1] : vector<8x128xf32> to vector<8xf32>
      %50 = vector.shape_cast %49 : vector<8xf32> to vector<8x1xf32>
      %cst_33 = arith.constant dense<0x7F800000> : vector<8xf32>
      %51 = vector.multi_reduction <minimumf>, %48, %cst_33 [1] : vector<8x128xf32> to vector<8xf32>
      %52 = vector.shape_cast %51 : vector<8xf32> to vector<8x1xf32>
      %cst_34 = arith.constant dense<0.000000e+00> : vector<1xf32>
      %53 = vector.multi_reduction <add>, %50, %cst_34 [0] : vector<8x1xf32> to vector<1xf32>
      %54 = vector.shape_cast %53 : vector<1xf32> to vector<1x1xf32>
      %cst_35 = arith.constant 8.000000e+00 : f32
      %55 = vector.broadcast %cst_35 : f32 to vector<1x1xf32>
      %56 = arith.divf %54, %55 : vector<1x1xf32>
      %cst_36 = arith.constant dense<0.000000e+00> : vector<1xf32>
      %57 = vector.multi_reduction <add>, %52, %cst_36 [0] : vector<8x1xf32> to vector<1xf32>
      %58 = vector.shape_cast %57 : vector<1xf32> to vector<1x1xf32>
      %cst_37 = arith.constant 8.000000e+00 : f32
      %59 = vector.broadcast %cst_37 : f32 to vector<1x1xf32>
      %60 = arith.divf %58, %59 : vector<1x1xf32>
      %61 = vector.broadcast %50 : vector<8x1xf32> to vector<8x128xf32>
      %62 = arith.cmpf oge, %46, %61 : vector<8x128xf32>
      %c128_i32 = arith.constant 128 : i32
      %63 = vector.broadcast %c128_i32 : i32 to vector<8x128xi32>
      %64 = arith.select %62, %0, %63 : vector<8x128xi1>, vector<8x128xi32>
      %cst_38 = arith.constant dense<2147483647> : vector<8xi32>
      %65 = vector.multi_reduction <minsi>, %64, %cst_38 [1] : vector<8x128xi32> to vector<8xi32>
      %66 = vector.shape_cast %65 : vector<8xi32> to vector<8x1xi32>
      %67 = vector.broadcast %66 : vector<8x1xi32> to vector<8x128xi32>
      %68 = arith.cmpi eq, %0, %67 : vector<8x128xi32>
      %69 = arith.extui %68 : vector<8x128xi1> to vector<8x128xi32>
      %70 = arith.sitofp %69 : vector<8x128xi32> to vector<8x128xf32>
      %cst_39 = arith.constant dense<0xFF800000> : vector<128xf32>
      %71 = vector.multi_reduction <maximumf>, %70, %cst_39 [0] : vector<8x128xf32> to vector<128xf32>
      %72 = vector.shape_cast %71 : vector<128xf32> to vector<1x128xf32>
      %cst_40 = arith.constant dense<0.000000e+00> : vector<1xf32>
      %73 = vector.multi_reduction <add>, %72, %cst_40 [1] : vector<1x128xf32> to vector<1xf32>
      %74 = vector.shape_cast %73 : vector<1xf32> to vector<1x1xf32>
      %75 = tpu.iota {dimensions = array<i32: 1>} : vector<1x128xi32>
      %cst_41 = arith.constant 0.000000e+00 : f32
      %76 = vector.broadcast %cst_41 : f32 to vector<1x128xf32>
      %c0_i32_42 = arith.constant 0 : i32
      %77 = vector.broadcast %c0_i32_42 : i32 to vector<1x128xi32>
      %78 = arith.cmpi eq, %75, %77 : vector<1x128xi32>
      %79 = vector.shape_cast %31 : vector<1x1xf32> to vector<1x1xf32>
      %80 = vector.broadcast %79 : vector<1x1xf32> to vector<1x128xf32>
      %81 = arith.select %78, %80, %76 : vector<1x128xi1>, vector<1x128xf32>
      %c1_i32 = arith.constant 1 : i32
      %82 = vector.broadcast %c1_i32 : i32 to vector<1x128xi32>
      %83 = arith.cmpi eq, %75, %82 : vector<1x128xi32>
      %84 = vector.shape_cast %42 : vector<1x1xf32> to vector<1x1xf32>
      %85 = vector.broadcast %84 : vector<1x1xf32> to vector<1x128xf32>
      %86 = arith.select %83, %85, %76 : vector<1x128xi1>, vector<1x128xf32>
      %87 = arith.addf %81, %86 : vector<1x128xf32>
      %c2_i32 = arith.constant 2 : i32
      %88 = vector.broadcast %c2_i32 : i32 to vector<1x128xi32>
      %89 = arith.cmpi eq, %75, %88 : vector<1x128xi32>
      %90 = vector.shape_cast %56 : vector<1x1xf32> to vector<1x1xf32>
      %91 = vector.broadcast %90 : vector<1x1xf32> to vector<1x128xf32>
      %92 = arith.select %89, %91, %76 : vector<1x128xi1>, vector<1x128xf32>
      %93 = arith.addf %87, %92 : vector<1x128xf32>
      %c3_i32_43 = arith.constant 3 : i32
      %94 = vector.broadcast %c3_i32_43 : i32 to vector<1x128xi32>
      %95 = arith.cmpi eq, %75, %94 : vector<1x128xi32>
      %96 = vector.shape_cast %60 : vector<1x1xf32> to vector<1x1xf32>
      %97 = vector.broadcast %96 : vector<1x1xf32> to vector<1x128xf32>
      %98 = arith.select %95, %97, %76 : vector<1x128xi1>, vector<1x128xf32>
      %99 = arith.addf %93, %98 : vector<1x128xf32>
      %c4_i32 = arith.constant 4 : i32
      %100 = vector.broadcast %c4_i32 : i32 to vector<1x128xi32>
      %101 = arith.cmpi eq, %75, %100 : vector<1x128xi32>
      %102 = vector.shape_cast %74 : vector<1x1xf32> to vector<1x1xf32>
      %103 = vector.broadcast %102 : vector<1x1xf32> to vector<1x128xf32>
      %104 = arith.select %101, %103, %76 : vector<1x128xi1>, vector<1x128xf32>
      %105 = arith.addf %99, %104 : vector<1x128xf32>
      %c0_44 = arith.constant 0 : index
      %c0_45 = arith.constant 0 : index
      %106 = vector.load %arg4[%c0_44, %c0_45] : memref<1x128xf32, #tpu.memory_space<vmem>>, vector<1x128xf32>
      tpu.vector_store %arg4[%c0_44, %c0_45], %105 {strides = array<i32>} : memref<1x128xf32, #tpu.memory_space<vmem>>, vector<1x128xf32>,
    } else {
    }
    return
  }
  func.func @transform_0(%arg0: i32) -> (i32, i32) {
    %c0_i32 = arith.constant 0 : i32
    %c0_i32_0 = arith.constant 0 : i32
    return %arg0, %c0_i32 : i32, i32
  }
  func.func @transform_1(%arg0: i32) -> (i32, i32) {
    %c4_i32 = arith.constant 4 : i32
    %c0_i32 = arith.constant 0 : i32
    %c0_i32_0 = arith.constant 0 : i32
    return %c4_i32, %c0_i32 : i32, i32
  }
  func.func @transform_2(%arg0: i32) -> (i32, i32) {
    %c0_i32 = arith.constant 0 : i32
    %c0_i32_0 = arith.constant 0 : i32
    %c0_i32_1 = arith.constant 0 : i32
    return %c0_i32, %c0_i32_0 : i32, i32
  }
  func.func @transform_3(%arg0: i32) -> (i32, i32) {
    %c0_i32 = arith.constant 0 : i32
    %c0_i32_0 = arith.constant 0 : i32
    %c0_i32_1 = arith.constant 0 : i32
    return %c0_i32, %c0_i32_0 : i32, i32
  }
}

</mosaic_0001>

<llo_original>
// kernel: sdpn_loss_forward.2
$region0: #{sdpn_loss_forward.2}
  #allocation0 [shape = 'u32[]', space=smem, size = 0x4, offset = 0x4, fixed_abs, tag = 'smem constant byte address 0x4 - core index']
  #allocation1 [shape = 'u32[72,128]{1,0:T(1,128)}', space=vmem, size = 0x9000, scoped, tag = 'internal scratch']
  %s0 = inlined_call_operand.vmem [shape: bf16[48,128], index: 0, kind: input, shape index: {}]
  %s1 = inlined_call_operand.vmem [shape: bf16[128,128], index: 1, kind: input, shape index: {}]
  %s2 = inlined_call_operand.vmem [shape: f32[1,128], index: 2, kind: input, shape index: {}]
  %s3 = inlined_call_operand.vmem [shape: f32[128,128], index: 3, kind: input, shape index: {}]
  %s4 = inlined_call_operand.vmem [shape: f32[48,128], index: 4, kind: output, shape index: {}]
  %s5 = sld [smem:[#allocation0]]
  $region49: #{sdpn_loss_forward.2} parent=0
    _
  %s7 = ssub.s32 1, %s5
  %s8 = scalar_select 0, %s7, %s5
  loop: start=0, step=1, limit=4
  $region2: #{sdpn_loss_forward.2} parent=0 // loop_pre_header
    _
  $region3: #{sdpn_loss_forward.2} parent=0 // loop_header
    %s10 = sphi 0, %s14
    %p11 = scmp.ge.s32.totalorder %s10, 4
    %s20 = sphi 0, %s22
    %s23 = sphi 0, %s20
    %s24 = sphi 0, %s23
    %s40 = sphi 0, %s24
    %s44 = sphi 0, %s44
    %s46 = sphi 0, %s44
    %s47 = sphi 0, %s46
    %s61 = sphi 0, %s47
    %s65 = sphi 0, %s65
    %s67 = sphi 0, %s65
    %s68 = sphi 0, %s67
    %s82 = sphi 0, %s68
    %s86 = sphi 0, %s86
    %s88 = sphi 0, %s86
    %s89 = sphi 0, %s88
    %s103 = sphi 0, %s89
    %s109 = sphi 0, %s111
    %s112 = sphi 0, %s109
    %s113 = sphi 0, %s112
    %s129 = sphi 0, %s113
  $region4: #{sdpn_loss_forward.2} parent=0 // loop_header_branch
    %13 = sbr.rel (%p11) target = $region8
  $region5: #{sdpn_loss_forward.2} parent=0 // loop_body
    %s15 = ssub.s32 %s10, 1
    %s16 = ssub.s32 %s10, 2
    %s17 = sadd.s32 %s10, 1
    %s18 = ssub.s32 %s10, %s17
    %p19 = scmp.eq.s32.totalorder %s18, 0
    %s21 = sadd.s32 %s20, 1
    %s22 = scalar_select %p19, %s20, %s21
    %p25 = pneg %p19
    %p26 = scmp.eq.s32.totalorder %s10, 1
    %p27 = por %p25, %p26
    %p28 = scmp.ne.s32.totalorder %s20, %s23
    %p29 = scmp.eq.s32.totalorder %s10, 0
    %p30 = por %p28, %p29
    %p31 = scmp.ne.s32.totalorder %s20, %s23
    %p32 = scmp.eq.s32.totalorder %s15, 1
    %p33 = por %p31, %p32
    %p34 = scmp.ne.s32.totalorder %s23, %s24
    %p35 = scmp.eq.s32.totalorder %s15, 0
    %p36 = por %p34, %p35
    %p37 = scmp.ne.s32.totalorder %s23, %s24
    %p38 = scmp.eq.s32.totalorder %s16, 1
    %p39 = por %p37, %p38
    %p41 = scmp.ne.s32.totalorder %s24, %s40
    %p42 = scmp.eq.s32.totalorder %s16, 0
    %p43 = por %p41, %p42
    %s45 = sadd.s32 %s44, 1
    %p48 = scmp.eq.s32.totalorder %s10, 1
    %p49 = scmp.ne.s32.totalorder %s44, %s46
    %p50 = scmp.eq.s32.totalorder %s10, 0
    %p51 = por %p49, %p50
    %p52 = scmp.ne.s32.totalorder %s44, %s46
    %p53 = scmp.eq.s32.totalorder %s15, 1
    %p54 = por %p52, %p53
    %p55 = scmp.ne.s32.totalorder %s46, %s47
    %p56 = scmp.eq.s32.totalorder %s15, 0
    %p57 = por %p55, %p56
    %p58 = scmp.ne.s32.totalorder %s46, %s47
    %p59 = scmp.eq.s32.totalorder %s16, 1
    %p60 = por %p58, %p59
    %p62 = scmp.ne.s32.totalorder %s47, %s61
    %p63 = scmp.eq.s32.totalorder %s16, 0
    %p64 = por %p62, %p63
    %s66 = sadd.s32 %s65, 1
    %p69 = scmp.eq.s32.totalorder %s10, 1
    %p70 = scmp.ne.s32.totalorder %s65, %s67
    %p71 = scmp.eq.s32.totalorder %s10, 0
    %p72 = por %p70, %p71
    %p73 = scmp.ne.s32.totalorder %s65, %s67
    %p74 = scmp.eq.s32.totalorder %s15, 1
    %p75 = por %p73, %p74
    %p76 = scmp.ne.s32.totalorder %s67, %s68
    %p77 = scmp.eq.s32.totalorder %s15, 0
    %p78 = por %p76, %p77
    %p79 = scmp.ne.s32.totalorder %s67, %s68
    %p80 = scmp.eq.s32.totalorder %s16, 1
    %p81 = por %p79, %p80
    %p83 = scmp.ne.s32.totalorder %s68, %s82
    %p84 = scmp.eq.s32.totalorder %s16, 0
    %p85 = por %p83, %p84
    %s87 = sadd.s32 %s86, 1
    %p90 = scmp.eq.s32.totalorder %s10, 1
    %p91 = scmp.ne.s32.totalorder %s86, %s88
    %p92 = scmp.eq.s32.totalorder %s10, 0
    %p93 = por %p91, %p92
    %p94 = scmp.ne.s32.totalorder %s86, %s88
    %p95 = scmp.eq.s32.totalorder %s15, 1
    %p96 = por %p94, %p95
    %p97 = scmp.ne.s32.totalorder %s88, %s89
    %p98 = scmp.eq.s32.totalorder %s15, 0
    %p99 = por %p97, %p98
    %p100 = scmp.ne.s32.totalorder %s88, %s89
    %p101 = scmp.eq.s32.totalorder %s16, 1
    %p102 = por %p100, %p101
    %p104 = scmp.ne.s32.totalorder %s89, %s103
    %p105 = scmp.eq.s32.totalorder %s16, 0
    %p106 = por %p104, %p105
    %s107 = ssub.s32 %s10, %s17
    %p108 = scmp.eq.s32.totalorder %s107, 0
    %s110 = sadd.s32 %s109, 1
    %s111 = scalar_select %p108, %s109, %s110
    %p114 = pneg %p108
    %p115 = scmp.eq.s32.totalorder %s10, 1
    %p116 = por %p114, %p115
    %p117 = scmp.ne.s32.totalorder %s109, %s112
    %p118 = scmp.eq.s32.totalorder %s10, 0
    %p119 = por %p117, %p118
    %p120 = scmp.ne.s32.totalorder %s109, %s112
    %p121 = scmp.eq.s32.totalorder %s15, 1
    %p122 = por %p120, %p121
    %p123 = scmp.ne.s32.totalorder %s112, %s113
    %p124 = scmp.eq.s32.totalorder %s15, 0
    %p125 = por %p123, %p124
    %p126 = scmp.ne.s32.totalorder %s112, %s113
    %p127 = scmp.eq.s32.totalorder %s16, 1
    %p128 = por %p126, %p127
    %p130 = scmp.ne.s32.totalorder %s113, %s129
    %p131 = scmp.eq.s32.totalorder %s16, 0
    %p132 = por %p130, %p131
    %p133 = scmp.le.s32.totalorder 1, %s10
    %p134 = scmp.lt.s32.totalorder %s10, 3
    %p135 = pnand %p133, %p134
    %p136 = pneg %p135
    // Predicated region
    $region9: #{sdpn_loss_forward.2} parent=5 // pred_check
      _
    $region10: #{sdpn_loss_forward.2} parent=5 // pred_check_branch
      %138 = sbr.rel (%p135) target = $region12
    $region11: #{sdpn_loss_forward.2} parent=5 // pred_region
      %s139 = ssub.s32 %s10, 1
      // Predicated region
      $region13: #{sdpn_loss_forward.2} parent=11 // pred_check
        %p140 = pneg %p57
      $region14: #{sdpn_loss_forward.2} parent=11 // pred_check_branch
        %142 = sbr.rel (%p140) target = $region16
      $region15: #{sdpn_loss_forward.2} parent=11 // pred_region
        _
      $region16: #{sdpn_loss_forward.2} parent=11 // pred_fallthru
        _
      // Predicated region
      $region17: #{sdpn_loss_forward.2} parent=11 // pred_check
        %p143 = pneg %p78
      $region18: #{sdpn_loss_forward.2} parent=11 // pred_check_branch
        %145 = sbr.rel (%p143) target = $region20
      $region19: #{sdpn_loss_forward.2} parent=11 // pred_region
        _
      $region20: #{sdpn_loss_forward.2} parent=11 // pred_fallthru
        _
      // Predicated region
      $region21: #{sdpn_loss_forward.2} parent=11 // pred_check
        %p146 = pneg %p99
      $region22: #{sdpn_loss_forward.2} parent=11 // pred_check_branch
        %148 = sbr.rel (%p146) target = $region24
      $region23: #{sdpn_loss_forward.2} parent=11 // pred_region
        _
      $region24: #{sdpn_loss_forward.2} parent=11 // pred_fallthru
        _
    $region12: #{sdpn_loss_forward.2} parent=5 // pred_fallthru
      _
    %p149 = scmp.lt.s32.totalorder %s10, 2
    // Predicated region
    $region25: #{sdpn_loss_forward.2} parent=5 // pred_check
      %p150 = pneg %p149
    $region26: #{sdpn_loss_forward.2} parent=5 // pred_check_branch
      %152 = sbr.rel (%p150) target = $region28
    $region27: #{sdpn_loss_forward.2} parent=5 // pred_region
      // Predicated region
      $region29: #{sdpn_loss_forward.2} parent=27 // pred_check
        %p153 = pneg %p30
      $region30: #{sdpn_loss_forward.2} parent=27 // pred_check_branch
        %155 = sbr.rel (%p153) target = $region32
      $region31: #{sdpn_loss_forward.2} parent=27 // pred_region
        %s156 = smul.u32 3, %s10
        %p157 = scmp.lt.s32.totalorder %s156, 5
        %s158 = scalar_select %p157, %s156, 5
        %s159 = smul.addr %s158, 4
        %s160 = scalar_lea.vmem %s0, %s159
        %s161 = smul.u32 3, %s10
      $region32: #{sdpn_loss_forward.2} parent=27 // pred_fallthru
        _
    $region28: #{sdpn_loss_forward.2} parent=5 // pred_fallthru
      _
    %p162 = scmp.le.s32.totalorder 1, %s10
    %p163 = scmp.lt.s32.totalorder %s10, 3
    %p164 = pnand %p162, %p163
    %p165 = pneg %p164
    // Predicated region
    $region33: #{sdpn_loss_forward.2} parent=5 // pred_check
      _
    $region34: #{sdpn_loss_forward.2} parent=5 // pred_check_branch
      %167 = sbr.rel (%p164) target = $region36
    $region35: #{sdpn_loss_forward.2} parent=5 // pred_region
      %s168 = ssub.s32 %s10, 1
      %s169 = smul.u32 3, %s15
      %p170 = scmp.lt.s32.totalorder %s169, 5
      %s171 = scalar_select %p170, %s169, 5
      %s172 = smul.addr %s171, 4
      %s173 = scalar_lea.vmem %s0, %s172
      %p174 = pneg %p36
      %p175 = pneg %p33
      %p176 = pneg %p57
      %p177 = pneg %p54
      %p178 = pneg %p78
      %p179 = pneg %p75
      %p180 = pneg %p99
      %p181 = pneg %p96
      %p182 = pneg %p125
      %p183 = pneg %p122
      %s184 = smul.u32 3, %s15
      %p185 = scmp.lt.s32.totalorder %s184, 5
      %s186 = scalar_select %p185, %s184, 5
      %s187 = smul.addr %s186, 8
      %s188 = scalar_lea.vmem %s4, %s187
      %s189 = smul.u32 3, %s15
      %p190 = scmp.lt.s32.totalorder %s189, 5
      %s191 = scalar_select %p190, %s189, 5
      %s192 = smul.addr %s191, 4
      %s193 = scalar_lea.vmem %s0, %s192
      %s194 = smul.u32 3, %s15
      %s195 = smul.u32 3, %s15
      %p196 = scmp.lt.s32.totalorder %s195, 5
      %s197 = scalar_select %p196, %s195, 5
      %s198 = smul.addr %s197, 8
      %s199 = scalar_lea.vmem %s4, %s198
      %s200 = smul.u32 3, %s15
      %v201 = vld [vmem:[%s193] sm:$0xf]
      %v202 = vld [vmem:[%s193 + $0x4] sm:$0xf]
      %v203 = vld [vmem:[%s193 + $0x8] sm:$0xf]
      %v204 = vunpack.c.l.bf16 %v201
      %v205 = vunpack.c.l.bf16 %v202
      %v206 = vunpack.c.l.bf16 %v203
      %v207 = vmul.f32 %v204, %v204
      %v208 = vmul.f32 %v205, %v205
      %v209 = vmul.f32 %v206, %v206
      %210 = vadd.xlane.f32.xlu0 %v207
      %v211 = vpop.xlane.xlu0 %210
      %212 = vadd.xlane.f32.xlu0 %v208
      %v213 = vpop.xlane.xlu0 %212
      %214 = vadd.xlane.f32.xlu0 %v209
      %v215 = vpop.xlane.xlu0 %214
      %v216 = vmax.f32 %v211, 1e-24
      %v217 = vmax.f32 %v213, 1e-24
      %v218 = vmax.f32 %v215, 1e-24
      %v219 = vrsqrt.pop %v216
      %v220 = vmul.f32 %v219, %v216
      %v221 = vmul.f32 %v220, %v219
      %v222 = vmul.f32 0.5, %v221
      %v223 = vsub.f32 1.5, %v222
      %v224 = vmul.f32 %v219, %v223
      %vm225 = vweird.f32 %v216
      %vm226 = vweird.f32 %v219
      %vm227 = vmor %vm225, %vm226
      %v228 = vsel %vm227, %v219, %v224
      %v229 = vrsqrt.pop %v217
      %v230 = vmul.f32 %v229, %v217
      %v231 = vmul.f32 %v230, %v229
      %v232 = vmul.f32 0.5, %v231
      %v233 = vsub.f32 1.5, %v232
      %v234 = vmul.f32 %v229, %v233
      %vm235 = vweird.f32 %v217
      %vm236 = vweird.f32 %v229
      %vm237 = vmor %vm235, %vm236
      %v238 = vsel %vm237, %v229, %v234
      %v239 = vrsqrt.pop %v218
      %v240 = vmul.f32 %v239, %v218
      %v241 = vmul.f32 %v240, %v239
      %v242 = vmul.f32 0.5, %v241
      %v243 = vsub.f32 1.5, %v242
      %v244 = vmul.f32 %v239, %v243
      %vm245 = vweird.f32 %v218
      %vm246 = vweird.f32 %v239
      %vm247 = vmor %vm245, %vm246
      %v248 = vsel %vm247, %v239, %v244
      %v249 = vmul.f32 %v204, %v228
      %v250 = vmul.f32 %v205, %v238
      %v251 = vmul.f32 %v206, %v248
      %v252 = vpack.c.bf16 %v250, %v249
      %v253 = vpack.c.bf16 %v251, %v251
      %v254 = vld [vmem:[%s1] sm:$0xf]
      %v255 = vld [vmem:[%s1 + $0x4] sm:$0xf]
      %v256 = vld [vmem:[%s1 + $0x8] sm:$0xf]
      %v257 = vld [vmem:[%s1 + $0xc] sm:$0xf]
      %v258 = vld [vmem:[%s1 + $0x10] sm:$0xf]
      %v259 = vld [vmem:[%s1 + $0x14] sm:$0xf]
      %v260 = vld [vmem:[%s1 + $0x18] sm:$0xf]
      %v261 = vld [vmem:[%s1 + $0x1c] sm:$0xf]
      %v262 = vld [vmem:[%s1 + $0x20] sm:$0xf]
      %v263 = vld [vmem:[%s1 + $0x24] sm:$0xf]
      %v264 = vld [vmem:[%s1 + $0x28] sm:$0xf]
      %v265 = vld [vmem:[%s1 + $0x2c] sm:$0xf]
      %v266 = vld [vmem:[%s1 + $0x30] sm:$0xf]
      %v267 = vld [vmem:[%s1 + $0x34] sm:$0xf]
      %v268 = vld [vmem:[%s1 + $0x38] sm:$0xf]
      %v269 = vld [vmem:[%s1 + $0x3c] sm:$0xf]
      %v270 = vld [vmem:[%s2] sm:$0x1]
      %v272 = vperm.slane %v270, 0
      %v290 = vunpack.c.l.b16 %v254
      %v291 = vunpack.c.l.b16 %v255
      %v292 = vunpack.c.l.b16 %v256
      %v293 = vunpack.c.l.b16 %v257
      %v294 = vunpack.c.l.b16 %v258
      %v295 = vunpack.c.l.b16 %v259
      %v296 = vunpack.c.l.b16 %v260
      %v297 = vunpack.c.l.b16 %v261
      %v298 = vunpack.c.l.b16 %v262
      %v299 = vunpack.c.l.b16 %v263
      %v300 = vunpack.c.l.b16 %v264
      %v301 = vunpack.c.l.b16 %v265
      %v302 = vunpack.c.l.b16 %v266
      %v303 = vunpack.c.l.b16 %v267
      %v304 = vunpack.c.l.b16 %v268
      %v305 = vunpack.c.l.b16 %v269
      %v306 = vpack.c.b16 %v291, %v290
      %v307 = vpack.c.b16 %v293, %v292
      %v308 = vpack.c.b16 %v295, %v294
      %v309 = vpack.c.b16 %v297, %v296
      %v310 = vpack.c.b16 %v299, %v298
      %v311 = vpack.c.b16 %v301, %v300
      %v312 = vpack.c.b16 %v303, %v302
      %v313 = vpack.c.b16 %v305, %v304
      %322 = vmatpush.bf16.msra.mxu0 %v313
      %323 = vmatpush.bf16.msra.mxu0 %v312
      %324 = vmatpush.bf16.msra.mxu0 %v311
      %325 = vmatpush.bf16.msra.mxu0 %v310
      %326 = vmatpush.bf16.msra.mxu0 %v309
      %327 = vmatpush.bf16.msra.mxu0 %v308
      %328 = vmatpush.bf16.msra.mxu0 %v307
      %329 = vmatpush.bf16.msra.mxu0 %v306
      %330 = vmatmul.bf16.gmra.mxu0 %v252
      %v331 = vpop.f32.mrf.mxu0
      %v332 = vadd.f32 %v272, %v331
      %v333 = vpop.f32.mrf.mxu0
      %v334 = vadd.f32 %v272, %v333
      %335 = vmatmul.bf16.gmra.mxu0 %v253
      %v336 = vpop.f32.mrf.mxu0
      %v337 = vadd.f32 %v272, %v336
      %v338 = vpop.f32.mrf.mxu0
      %339 = vdwg.mxu0
      %340 = vmax.xlane.f32.xlu0 %v332
      %v341 = vpop.xlane.xlu0 %340
      %342 = vmax.xlane.f32.xlu0 %v334
      %v343 = vpop.xlane.xlu0 %342
      %344 = vmax.xlane.f32.xlu0 %v337
      %v345 = vpop.xlane.xlu0 %344
      %v346 = vsub.f32 %v332, %v341
      %v347 = vsub.f32 %v334, %v343
      %v348 = vsub.f32 %v337, %v345
      %v349 = vmul.f32 %v346, 1.442695
      %v350 = vpow.pop %v349
      %v351 = vmul.f32 %v347, 1.442695
      %v352 = vpow.pop %v351
      %v353 = vmul.f32 %v348, 1.442695
      %v354 = vpow.pop %v353
      %355 = vadd.xlane.f32.xlu0 %v350
      %v356 = vpop.xlane.xlu0 %355
      %357 = vadd.xlane.f32.xlu0 %v352
      %v358 = vpop.xlane.xlu0 %357
      %359 = vadd.xlane.f32.xlu0 %v354
      %v360 = vpop.xlane.xlu0 %359
      %v361 = vrcp.pop %v356
      %v362 = vrcp.pop %v358
      %v363 = vrcp.pop %v360
      %v364 = vmul.f32 %v350, %v361
      %v365 = vmul.f32 %v352, %v362
      %v366 = vmul.f32 %v354, %v363
      %v367 = vld [vmem:[%s3] sm:$0xff]
      %v368 = vld [vmem:[%s3 + $0x8] sm:$0xff]
      %v369 = vld [vmem:[%s3 + $0x10] sm:$0xff]
      %v370 = vld [vmem:[%s3 + $0x18] sm:$0xff]
      %v371 = vld [vmem:[%s3 + $0x20] sm:$0xff]
      %v372 = vld [vmem:[%s3 + $0x28] sm:$0xff]
      %v373 = vld [vmem:[%s3 + $0x30] sm:$0xff]
      %v374 = vld [vmem:[%s3 + $0x38] sm:$0xff]
      %v375 = vld [vmem:[%s3 + $0x40] sm:$0xff]
      %v376 = vld [vmem:[%s3 + $0x48] sm:$0xff]
      %v377 = vld [vmem:[%s3 + $0x50] sm:$0xff]
      %v378 = vld [vmem:[%s3 + $0x58] sm:$0xff]
      %v379 = vld [vmem:[%s3 + $0x60] sm:$0xff]
      %v380 = vld [vmem:[%s3 + $0x68] sm:$0xff]
      %v381 = vld [vmem:[%s3 + $0x70] sm:$0xff]
      %v382 = vld [vmem:[%s3 + $0x78] sm:$0xff]
      %383 = vmatpush.msra.mxu0 %v382
      %384 = vmatpush.msra.mxu0 %v381
      %385 = vmatpush.msra.mxu0 %v380
      %386 = vmatpush.msra.mxu0 %v379
      %387 = vmatpush.msra.mxu0 %v378
      %388 = vmatpush.msra.mxu0 %v377
      %389 = vmatpush.msra.mxu0 %v376
      %390 = vmatpush.msra.mxu0 %v375
      %391 = vmatpush.msra.mxu0 %v374
      %392 = vmatpush.msra.mxu0 %v373
      %393 = vmatpush.msra.mxu0 %v372
      %394 = vmatpush.msra.mxu0 %v371
      %395 = vmatpush.msra.mxu0 %v370
      %396 = vmatpush.msra.mxu0 %v369
      %397 = vmatpush.msra.mxu0 %v368
      %398 = vmatpush.msra.mxu0 %v367
      %399 = vmatmul.f32.gmra.mxu0 %v364
      %v400 = vpop.f32.mrf.mxu0
      %v401 = vadd.f32 0.0, %v400
      %402 = vmatmul.f32.gmra.mxu0 %v365
      %v403 = vpop.f32.mrf.mxu0
      %v404 = vadd.f32 0.0, %v403
      %405 = vmatmul.f32.gmra.mxu0 %v366
      %v406 = vpop.f32.mrf.mxu0
      %v407 = vadd.f32 0.0, %v406
      %408 = vdwg.mxu0
      %409 = vst [vmem:[%s199] sm:$0xff] %v401
      %410 = vst [vmem:[%s199 + $0x8] sm:$0xff] %v404
      %411 = vst [vmem:[%s199 + $0x10] sm:$0xff] %v407
      %s412 = smul.u32 3, %s15
      %p413 = scmp.lt.s32.totalorder %s412, 5
      %s414 = scalar_select %p413, %s412, 5
      %s415 = smul.addr %s414, 8
      %s416 = scalar_lea.vmem %s4, %s415
      // Predicated region
      $region37: #{sdpn_loss_forward.2} parent=35 // pred_check
        %p417 = pneg %p122
      $region38: #{sdpn_loss_forward.2} parent=35 // pred_check_branch
        %419 = sbr.rel (%p417) target = $region40
      $region39: #{sdpn_loss_forward.2} parent=35 // pred_region
        %s420 = smul.u32 3, %s15
      $region40: #{sdpn_loss_forward.2} parent=35 // pred_fallthru
        _
    $region36: #{sdpn_loss_forward.2} parent=5 // pred_fallthru
      _
    %p421 = scmp.le.s32.totalorder 2, %s10
    // Predicated region
    $region41: #{sdpn_loss_forward.2} parent=5 // pred_check
      %p422 = pneg %p421
    $region42: #{sdpn_loss_forward.2} parent=5 // pred_check_branch
      %424 = sbr.rel (%p422) target = $region44
    $region43: #{sdpn_loss_forward.2} parent=5 // pred_region
      %s425 = ssub.s32 %s10, 2
      // Predicated region
      $region45: #{sdpn_loss_forward.2} parent=43 // pred_check
        %p426 = pneg %p128
      $region46: #{sdpn_loss_forward.2} parent=43 // pred_check_branch
        %428 = sbr.rel (%p426) target = $region48
      $region47: #{sdpn_loss_forward.2} parent=43 // pred_region
        %s429 = smul.u32 3, %s16
        %p430 = scmp.lt.s32.totalorder %s429, 5
        %s431 = scalar_select %p430, %s429, 5
        %s432 = smul.addr %s431, 8
        %s433 = scalar_lea.vmem %s4, %s432
      $region48: #{sdpn_loss_forward.2} parent=43 // pred_fallthru
        _
    $region44: #{sdpn_loss_forward.2} parent=5 // pred_fallthru
      _
  $region6: #{sdpn_loss_forward.2} parent=0 // loop_footer
    %s14 = sadd.s32 1, %s10
  $region7: #{sdpn_loss_forward.2} parent=0 // loop_footer_branch
    %9 = sbr.rel target = $region3
  $region8: #{sdpn_loss_forward.2} parent=0 // loop_exit
    _

// kernel: sdpn_loss_forward.3
$region0: #{sdpn_loss_forward.3}
  #allocation0 [shape = 'u32[]', space=smem, size = 0x4, offset = 0x4, fixed_abs, tag = 'smem constant byte address 0x4 - core index']
  #allocation1 [shape = 'u32[72,128]{1,0:T(1,128)}', space=vmem, size = 0x9000, scoped, tag = 'internal scratch']
  #allocation2 [shape = 'f32[8,128]{1,0:T(8,128)}', space=vmem, size = 0x1000, scoped, tag = 'scratch operand']
  #allocation3 [shape = 'f32[1,128]{1,0:T(1,128)}', space=vmem, size = 0x200, scoped, tag = 'scratch operand']
  #allocation4 [shape = 'f32[1,128]{1,0:T(1,128)}', space=vmem, size = 0x200, scoped, tag = 'scratch operand']
  %s0 = inlined_call_operand.vmem [shape: f32[48,128], index: 0, kind: input, shape index: {}, may-alias: {0,1}]
  %s1 = inlined_call_operand.vmem [shape: f32[48,128], index: 1, kind: input, shape index: {}, may-alias: {0,1}]
  %s2 = inlined_call_operand.hbm [shape: f32[8,128], index: 2, kind: output, shape index: {0}]
  %s3 = inlined_call_operand.vmem [shape: f32[1,128], index: 3, kind: output, shape index: {1}]
  %4 = xla_tuple %s2, %s3
  %s5 = sld [smem:[#allocation0]]
  $region57: #{sdpn_loss_forward.3} parent=0
    _
  %s7 = ssub.s32 1, %s5
  %s8 = scalar_select 0, %s7, %s5
  $region1: #{sdpn_loss_forward.3} parent=0
    #allocation5 [shape = 'u8[4096]{0}', space=vmem, size = 0x1000, scoped, tag = 'output window, operand 0, single buffered']
    #allocation6 [shape = 's32[2]{0}', space=sflag, size = 0x8, scoped, tag = 'scoped memory for sdpn_loss_forward.3']
    %9 = vsyncpa [#allocation6], 0
    loop: start=0, step=1, limit=6
    $region2: #{sdpn_loss_forward.3} parent=1 // loop_pre_header
      _
    $region3: #{sdpn_loss_forward.3} parent=1 // loop_header
      %s11 = sphi 0, %s15
      %p12 = scmp.ge.s32.totalorder %s11, 6
      %s21 = sphi 0, %s23
      %s24 = sphi 0, %s21
      %s25 = sphi 0, %s24
      %s41 = sphi 0, %s25
      %s45 = sphi 0, %s45
      %s47 = sphi 0, %s45
      %s48 = sphi 0, %s47
      %s62 = sphi 0, %s48
      %s66 = sphi 0, %s66
      %s68 = sphi 0, %s66
      %s69 = sphi 0, %s68
      %s83 = sphi 0, %s69
      %s87 = sphi 0, %s87
      %s89 = sphi 0, %s87
      %s90 = sphi 0, %s89
      %s104 = sphi 0, %s90
    $region4: #{sdpn_loss_forward.3} parent=1 // loop_header_branch
      %14 = sbr.rel (%p12) target = $region8
    $region5: #{sdpn_loss_forward.3} parent=1 // loop_body
      %s16 = ssub.s32 %s11, 1
      %s17 = ssub.s32 %s11, 2
      %s18 = sadd.s32 %s11, 1
      %s19 = ssub.s32 %s11, %s18
      %p20 = scmp.eq.s32.totalorder %s19, 0
      %s22 = sadd.s32 %s21, 1
      %s23 = scalar_select %p20, %s21, %s22
      %p26 = pneg %p20
      %p27 = scmp.eq.s32.totalorder %s11, 3
      %p28 = por %p26, %p27
      %p29 = scmp.ne.s32.totalorder %s21, %s24
      %p30 = scmp.eq.s32.totalorder %s11, 0
      %p31 = por %p29, %p30
      %p32 = scmp.ne.s32.totalorder %s21, %s24
      %p33 = scmp.eq.s32.totalorder %s16, 3
      %p34 = por %p32, %p33
      %p35 = scmp.ne.s32.totalorder %s24, %s25
      %p36 = scmp.eq.s32.totalorder %s16, 0
      %p37 = por %p35, %p36
      %p38 = scmp.ne.s32.totalorder %s24, %s25
      %p39 = scmp.eq.s32.totalorder %s17, 3
      %p40 = por %p38, %p39
      %p42 = scmp.ne.s32.totalorder %s25, %s41
      %p43 = scmp.eq.s32.totalorder %s17, 0
      %p44 = por %p42, %p43
      %s46 = sadd.s32 %s45, 1
      %p49 = scmp.eq.s32.totalorder %s11, 3
      %p50 = scmp.ne.s32.totalorder %s45, %s47
      %p51 = scmp.eq.s32.totalorder %s11, 0
      %p52 = por %p50, %p51
      %p53 = scmp.ne.s32.totalorder %s45, %s47
      %p54 = scmp.eq.s32.totalorder %s16, 3
      %p55 = por %p53, %p54
      %p56 = scmp.ne.s32.totalorder %s47, %s48
      %p57 = scmp.eq.s32.totalorder %s16, 0
      %p58 = por %p56, %p57
      %p59 = scmp.ne.s32.totalorder %s47, %s48
      %p60 = scmp.eq.s32.totalorder %s17, 3
      %p61 = por %p59, %p60
      %p63 = scmp.ne.s32.totalorder %s48, %s62
      %p64 = scmp.eq.s32.totalorder %s17, 0
      %p65 = por %p63, %p64
      %s67 = sadd.s32 %s66, 1
      %p70 = scmp.eq.s32.totalorder %s11, 3
      %p71 = scmp.ne.s32.totalorder %s66, %s68
      %p72 = scmp.eq.s32.totalorder %s11, 0
      %p73 = por %p71, %p72
      %p74 = scmp.ne.s32.totalorder %s66, %s68
      %p75 = scmp.eq.s32.totalorder %s16, 3
      %p76 = por %p74, %p75
      %p77 = scmp.ne.s32.totalorder %s68, %s69
      %p78 = scmp.eq.s32.totalorder %s16, 0
      %p79 = por %p77, %p78
      %p80 = scmp.ne.s32.totalorder %s68, %s69
      %p81 = scmp.eq.s32.totalorder %s17, 3
      %p82 = por %p80, %p81
      %p84 = scmp.ne.s32.totalorder %s69, %s83
      %p85 = scmp.eq.s32.totalorder %s17, 0
      %p86 = por %p84, %p85
      %s88 = sadd.s32 %s87, 1
      %p91 = scmp.eq.s32.totalorder %s11, 3
      %p92 = scmp.ne.s32.totalorder %s87, %s89
      %p93 = scmp.eq.s32.totalorder %s11, 0
      %p94 = por %p92, %p93
      %p95 = scmp.ne.s32.totalorder %s87, %s89
      %p96 = scmp.eq.s32.totalorder %s16, 3
      %p97 = por %p95, %p96
      %p98 = scmp.ne.s32.totalorder %s89, %s90
      %p99 = scmp.eq.s32.totalorder %s16, 0
      %p100 = por %p98, %p99
      %p101 = scmp.ne.s32.totalorder %s89, %s90
      %p102 = scmp.eq.s32.totalorder %s17, 3
      %p103 = por %p101, %p102
      %p105 = scmp.ne.s32.totalorder %s90, %s104
      %p106 = scmp.eq.s32.totalorder %s17, 0
      %p107 = por %p105, %p106
      %p108 = scmp.le.s32.totalorder 1, %s11
      %p109 = scmp.lt.s32.totalorder %s11, 5
      %p110 = pnand %p108, %p109
      %p111 = pneg %p110
      // Predicated region
      $region9: #{sdpn_loss_forward.3} parent=5 // pred_check
        _
      $region10: #{sdpn_loss_forward.3} parent=5 // pred_check_branch
        %113 = sbr.rel (%p110) target = $region12
      $region11: #{sdpn_loss_forward.3} parent=5 // pred_region
        %s114 = ssub.s32 %s11, 1
        // Predicated region
        $region13: #{sdpn_loss_forward.3} parent=11 // pred_check
          %p115 = pneg %p58
        $region14: #{sdpn_loss_forward.3} parent=11 // pred_check_branch
          %117 = sbr.rel (%p115) target = $region16
        $region15: #{sdpn_loss_forward.3} parent=11 // pred_region
          %s118 = scalar_lea.vmem %s1, 32
        $region16: #{sdpn_loss_forward.3} parent=11 // pred_fallthru
          _
      $region12: #{sdpn_loss_forward.3} parent=5 // pred_fallthru
        _
      %p119 = scmp.lt.s32.totalorder %s11, 4
      // Predicated region
      $region17: #{sdpn_loss_forward.3} parent=5 // pred_check
        %p120 = pneg %p119
      $region18: #{sdpn_loss_forward.3} parent=5 // pred_check_branch
        %122 = sbr.rel (%p120) target = $region20
      $region19: #{sdpn_loss_forward.3} parent=5 // pred_region
        // Predicated region
        $region21: #{sdpn_loss_forward.3} parent=19 // pred_check
          %p123 = pneg %p31
        $region22: #{sdpn_loss_forward.3} parent=19 // pred_check_branch
          %125 = sbr.rel (%p123) target = $region24
        $region23: #{sdpn_loss_forward.3} parent=19 // pred_region
          %p126 = scmp.lt.s32.totalorder %s11, 5
          %s127 = scalar_select %p126, %s11, 5
          %s128 = smul.addr %s127, 8
          %s129 = scalar_lea.vmem %s0, %s128
        $region24: #{sdpn_loss_forward.3} parent=19 // pred_fallthru
          _
      $region20: #{sdpn_loss_forward.3} parent=5 // pred_fallthru
        _
      %p130 = scmp.le.s32.totalorder 1, %s11
      %p131 = scmp.lt.s32.totalorder %s11, 5
      %p132 = pnand %p130, %p131
      %p133 = pneg %p132
      // Predicated region
      $region25: #{sdpn_loss_forward.3} parent=5 // pred_check
        _
      $region26: #{sdpn_loss_forward.3} parent=5 // pred_check_branch
        %135 = sbr.rel (%p132) target = $region28
      $region27: #{sdpn_loss_forward.3} parent=5 // pred_region
        %s136 = ssub.s32 %s11, 1
        %p137 = scmp.lt.s32.totalorder %s16, 5
        %s138 = scalar_select %p137, %s16, 5
        %s139 = smul.addr %s138, 8
        %s140 = scalar_lea.vmem %s0, %s139
        %p141 = pneg %p37
        %p142 = pneg %p34
        %s143 = scalar_lea.vmem %s1, 32
        %p144 = pneg %p58
        %p145 = pneg %p55
        %p146 = pneg %p79
        %p147 = pneg %p76
        %p148 = pneg %p100
        %p149 = pneg %p97
        %p150 = scmp.lt.s32.totalorder %s16, 5
        %s151 = scalar_select %p150, %s16, 5
        %s152 = smul.addr %s151, 8
        %s153 = scalar_lea.vmem %s0, %s152
        %s154 = scalar_lea.vmem %s1, 32
        %v155 = vlaneseq
        %v156 = vand.u32 %v155, 127
        %vm157 = vcmp.lt.s32.totalorder %v156, 64
        %p158 = scmp.eq.s32.totalorder %s16, 0
        // Predicated region
        $region29: #{sdpn_loss_forward.3} parent=27 // pred_check
          %p159 = pneg %p158
        $region30: #{sdpn_loss_forward.3} parent=27 // pred_check_branch
          %161 = sbr.rel (%p159) target = $region32
        $region31: #{sdpn_loss_forward.3} parent=27 // pred_region
          %v162 = vld [vmem:[%s154] sm:$0xff]
          %v163 = vmul.f32 %v162, %v162
          %v164 = vmul.f32 %v163, %v162
          %v165 = vmul.f32 %v164, %v162
          %v166 = vsel %vm157, %v165, 0.0
          %167 = vadd.xlane.f32.xlu0 %v166
          %v168 = vpop.xlane.xlu0 %167
          %v169 = vmax.f32 %v168, 1e-30
          %v170 = vrcp.pop %v169
          %v171 = vmul.f32 %v169, %v170
          %v172 = vsub.f32 1.0, %v171
          %v173 = vmul.f32 %v170, %v172
          %v174 = vadd.f32 %v170, %v173
          %vm175 = vweird.f32 %v169
          %vm176 = vweird.f32 %v170
          %vm177 = vmor %vm175, %vm176
          %v178 = vsel %vm177, %v170, %v174
          %v179 = vand.u32 2147483647, %v169
          %vm180 = vcmp.eq.f32.partialorder %v179, 8.507059e+37
          %v181 = vand.u32 %v169, 2147483648
          %v182 = vor.u32 1.1754944e-38, %v181
          %v183 = vsel %vm180, %v182, %v178
          %v184 = vmul.f32 %v166, %v183
          %185 = vadd.xlane.f32.xlu0 %v184
          %v186 = vpop.xlane.xlu0 %185
          %v187 = vrot.slane %v186, 4
          %v188 = vadd.f32 %v186, %v187
          %v189 = vrot.slane %v188, 2
          %v190 = vadd.f32 %v188, %v189
          %v191 = vrot.slane %v190, 1
          %v192 = vadd.f32 %v190, %v191
          %v193 = vmax.f32 %v192, 1e-30
          %v194 = vrcp.pop %v193
          %v195 = vmul.f32 %v193, %v194
          %v196 = vsub.f32 1.0, %v195
          %v197 = vmul.f32 %v194, %v196
          %v198 = vadd.f32 %v194, %v197
          %vm199 = vweird.f32 %v193
          %vm200 = vweird.f32 %v194
          %vm201 = vmor %vm199, %vm200
          %v202 = vsel %vm201, %v194, %v198
          %v203 = vand.u32 2147483647, %v193
          %vm204 = vcmp.eq.f32.partialorder %v203, 8.507059e+37
          %v205 = vand.u32 %v193, 2147483648
          %v206 = vor.u32 1.1754944e-38, %v205
          %v207 = vsel %vm204, %v206, %v202
          %v208 = vmul.f32 %v184, %v207
          %v209 = vrot.slane %v208, 4
          %v210 = vadd.f32 %v208, %v209
          %v211 = vrot.slane %v210, 2
          %v212 = vadd.f32 %v210, %v211
          %v213 = vrot.slane %v212, 1
          %v214 = vadd.f32 %v212, %v213
          %vm215 = vcmp.gt.f32.partialorder %v214, 0.0
          %v216 = vsel %vm215, %v214, 1.0
          %v217 = vrcp.pop %v216
          %v218 = vmul.f32 %v216, %v217
          %v219 = vsub.f32 1.0, %v218
          %v220 = vmul.f32 %v217, %v219
          %v221 = vadd.f32 %v217, %v220
          %vm222 = vweird.f32 %v216
          %vm223 = vweird.f32 %v217
          %vm224 = vmor %vm222, %vm223
          %v225 = vsel %vm224, %v217, %v221
          %v226 = vand.u32 2147483647, %v216
          %vm227 = vcmp.eq.f32.partialorder %v226, 8.507059e+37
          %v228 = vand.u32 %v216, 2147483648
          %v229 = vor.u32 1.1754944e-38, %v228
          %v230 = vsel %vm227, %v229, %v225
          %v231 = vmul.f32 %v208, %v230
          %v232 = vmul.f32 %v231, 0.015625
          %233 = vadd.xlane.f32.xlu0 %v232
          %v234 = vpop.xlane.xlu0 %233
          %v235 = vmax.f32 %v234, 1e-30
          %v236 = vrcp.pop %v235
          %v237 = vmul.f32 %v235, %v236
          %v238 = vsub.f32 1.0, %v237
          %v239 = vmul.f32 %v236, %v238
          %v240 = vadd.f32 %v236, %v239
          %vm241 = vweird.f32 %v235
          %vm242 = vweird.f32 %v236
          %vm243 = vmor %vm241, %vm242
          %v244 = vsel %vm243, %v236, %v240
          %v245 = vand.u32 2147483647, %v235
          %vm246 = vcmp.eq.f32.partialorder %v245, 8.507059e+37
          %v247 = vand.u32 %v235, 2147483648
          %v248 = vor.u32 1.1754944e-38, %v247
          %v249 = vsel %vm246, %v248, %v244
          %v250 = vmul.f32 %v232, %v249
          %v251 = vmul.f32 %v250, 0.125
          %v252 = vrot.slane %v251, 4
          %v253 = vadd.f32 %v251, %v252
          %v254 = vrot.slane %v253, 2
          %v255 = vadd.f32 %v253, %v254
          %v256 = vrot.slane %v255, 1
          %v257 = vadd.f32 %v255, %v256
          %vm258 = vcmp.gt.f32.partialorder %v257, 0.0
          %v259 = vsel %vm258, %v257, 1.0
          %v260 = vrcp.pop %v259
          %v261 = vmul.f32 %v259, %v260
          %v262 = vsub.f32 1.0, %v261
          %v263 = vmul.f32 %v260, %v262
          %v264 = vadd.f32 %v260, %v263
          %vm265 = vweird.f32 %v259
          %vm266 = vweird.f32 %v260
          %vm267 = vmor %vm265, %vm266
          %v268 = vsel %vm267, %v260, %v264
          %v269 = vand.u32 2147483647, %v259
          %vm270 = vcmp.eq.f32.partialorder %v269, 8.507059e+37
          %v271 = vand.u32 %v259, 2147483648
          %v272 = vor.u32 1.1754944e-38, %v271
          %v273 = vsel %vm270, %v272, %v268
          %v274 = vmul.f32 %v251, %v273
          %v275 = vmul.f32 %v274, 0.015625
          %276 = vadd.xlane.f32.xlu0 %v275
          %v277 = vpop.xlane.xlu0 %276
          %v278 = vmax.f32 %v277, 1e-30
          %v279 = vrcp.pop %v278
          %v280 = vmul.f32 %v278, %v279
          %v281 = vsub.f32 1.0, %v280
          %v282 = vmul.f32 %v279, %v281
          %v283 = vadd.f32 %v279, %v282
          %vm284 = vweird.f32 %v278
          %vm285 = vweird.f32 %v279
          %vm286 = vmor %vm284, %vm285
          %v287 = vsel %vm286, %v279, %v283
          %v288 = vand.u32 2147483647, %v278
          %vm289 = vcmp.eq.f32.partialorder %v288, 8.507059e+37
          %v290 = vand.u32 %v278, 2147483648
          %v291 = vor.u32 1.1754944e-38, %v290
          %v292 = vsel %vm289, %v291, %v287
          %v293 = vmul.f32 %v275, %v292
          %v294 = vmul.f32 %v293, 0.125
          %v295 = vrot.slane %v294, 4
          %v296 = vadd.f32 %v294, %v295
          %v297 = vrot.slane %v296, 2
          %v298 = vadd.f32 %v296, %v297
          %v299 = vrot.slane %v298, 1
          %v300 = vadd.f32 %v298, %v299
          %vm301 = vcmp.gt.f32.partialorder %v300, 0.0
          %v302 = vsel %vm301, %v300, 1.0
          %v303 = vrcp.pop %v302
          %v304 = vmul.f32 %v302, %v303
          %v305 = vsub.f32 1.0, %v304
          %v306 = vmul.f32 %v303, %v305
          %v307 = vadd.f32 %v303, %v306
          %vm308 = vweird.f32 %v302
          %vm309 = vweird.f32 %v303
          %vm310 = vmor %vm308, %vm309
          %v311 = vsel %vm310, %v303, %v307
          %v312 = vand.u32 2147483647, %v302
          %vm313 = vcmp.eq.f32.partialorder %v312, 8.507059e+37
          %v314 = vand.u32 %v302, 2147483648
          %v315 = vor.u32 1.1754944e-38, %v314
          %v316 = vsel %vm313, %v315, %v311
          %v317 = vmul.f32 %v294, %v316
          %v318 = vmul.f32 %v317, 0.015625
          %319 = vadd.xlane.f32.xlu0 %v318
          %v320 = vpop.xlane.xlu0 %319
          %v321 = vmax.f32 %v320, 1e-30
          %v322 = vrcp.pop %v321
          %v323 = vmul.f32 %v321, %v322
          %v324 = vsub.f32 1.0, %v323
          %v325 = vmul.f32 %v322, %v324
          %v326 = vadd.f32 %v322, %v325
          %vm327 = vweird.f32 %v321
          %vm328 = vweird.f32 %v322
          %vm329 = vmor %vm327, %vm328
          %v330 = vsel %vm329, %v322, %v326
          %v331 = vand.u32 2147483647, %v321
          %vm332 = vcmp.eq.f32.partialorder %v331, 8.507059e+37
          %v333 = vand.u32 %v321, 2147483648
          %v334 = vor.u32 1.1754944e-38, %v333
          %v335 = vsel %vm332, %v334, %v330
          %v336 = vmul.f32 %v318, %v335
          %v337 = vmul.f32 %v336, 0.125
          %v338 = vmul.f32 %v337, 8.0
          %339 = vst [vmem:[#allocation2] sm:$0xff] %v338
          %340 = vst [vmem:[#allocation3] sm:$0x1] 0.0
          %341 = vst [vmem:[#allocation4] sm:$0x1] 0.0
        $region32: #{sdpn_loss_forward.3} parent=27 // pred_fallthru
          _
        %v342 = vld [vmem:[%s153] sm:$0xff]
        %v343 = vld [vmem:[#allocation2] sm:$0xff]
        %v344 = vmax.f32 %v342, 1e-30
        %v345 = vlog2.pop %v344
        %v346 = vmul.f32 %v345, 0.6931472
        %v347 = vld [vmem:[#allocation3] sm:$0x1]
        %v348 = vsub.f32 0.0, %v343
        %v349 = vmul.f32 %v348, %v346
        %v350 = vrot.slane %v349, 4
        %v351 = vadd.f32 %v349, %v350
        %v352 = vrot.slane %v351, 2
        %v353 = vadd.f32 %v351, %v352
        %v354 = vrot.slane %v353, 1
        %v355 = vadd.f32 %v353, %v354
        %v356 = vadd.f32 %v347, %v355
        %357 = vst [vmem:[#allocation3] sm:$0x1] %v356
        %v358 = vld [vmem:[#allocation4] sm:$0x1]
        %v359 = vrot.slane %v342, 4
        %v360 = vadd.f32 %v342, %v359
        %v361 = vrot.slane %v360, 2
        %v362 = vadd.f32 %v360, %v361
        %v363 = vrot.slane %v362, 1
        %v364 = vadd.f32 %v362, %v363
        %v365 = vadd.f32 %v358, %v364
        %366 = vst [vmem:[#allocation4] sm:$0x1] %v365
        %p367 = scmp.eq.s32.totalorder %s16, 3
        // Predicated region
        $region33: #{sdpn_loss_forward.3} parent=27 // pred_check
          %p368 = pneg %p367
        $region34: #{sdpn_loss_forward.3} parent=27 // pred_check_branch
          %370 = sbr.rel (%p368) target = $region36
        $region35: #{sdpn_loss_forward.3} parent=27 // pred_region
          %v371 = vld [vmem:[#allocation3] sm:$0x1]
          %vm372 = vcmask 1040384
          %v373 = vsel %vm372, %v371, 0.0
          %374 = vadd.xlane.f32.xlu0 %v373
          %v375 = vpop.xlane.xlu0 %374
          %v376 = vmul.f32 %v375, 0.03125
          %v377 = vld [vmem:[#allocation4] sm:$0x1]
          %v378 = vmul.f32 %v377, 0.03125
          %v379 = vmax.f32 %v378, 1e-30
          %v380 = vlog2.pop %v379
          %v381 = vmul.f32 %v380, 0.6931472
          %v382 = vmul.f32 %v378, %v381
          %v383 = vsel %vm372, %v382, 0.0
          %384 = vadd.xlane.f32.xlu0 %v383
          %v385 = vpop.xlane.xlu0 %384
          %v386 = vadd.f32 %v385, 4.158883
          %v387 = vld [vmem:[#allocation2] sm:$0xff]
          %388 = vst [vmem:[#allocation5] sm:$0xff] %v387
          %v389 = vsel %vm157, %v387, -1e+30
          %v390 = vsel %vm157, %v387, 1e+30
          %391 = vmax.xlane.f32.xlu0 %v389
          %v392 = vpop.xlane.xlu0 %391
          %393 = vmin.xlane.f32.xlu0 %v390
          %v394 = vpop.xlane.xlu0 %393
          %v395 = vrot.slane %v392, 4
          %v396 = vadd.f32 %v392, %v395
          %v397 = vrot.slane %v396, 2
          %v398 = vadd.f32 %v396, %v397
          %v399 = vrot.slane %v398, 1
          %v400 = vadd.f32 %v398, %v399
          %v401 = vrcp.pop 8.0
          %v402 = vmul.f32 8.0, %v401
          %v403 = vsub.f32 1.0, %v402
          %v404 = vmul.f32 %v401, %v403
          %v405 = vadd.f32 %v401, %v404
          %vm406 = vweird.f32 %v401
          %v407 = vsel %vm406, %v401, %v405
          %v408 = vmul.f32 %v400, %v407
          %v409 = vrot.slane %v394, 4
          %v410 = vadd.f32 %v394, %v409
          %v411 = vrot.slane %v410, 2
          %v412 = vadd.f32 %v410, %v411
          %v413 = vrot.slane %v412, 1
          %v414 = vadd.f32 %v412, %v413
          %v415 = vmul.f32 %v414, %v407
          %vm416 = vcmp.ge.f32.partialorder %v389, %v392
          %v417 = vsel %vm416, %v156, 128
          %v418 = vand.u32 %v417, 65535
          %v419 = vshra.s32 %v417, 16
          %v420 = vcvt.s32.f32 %v418
          %v421 = vcvt.s32.f32 %v419
          %422 = vmin.xlane.f32.xlu0 %v421
          %v423 = vpop.xlane.xlu0 %422
          %vm424 = vcmp.eq.f32.partialorder %v421, %v423
          %v425 = vsel %vm424, %v420, inf
          %426 = vmin.xlane.f32.xlu0 %v425
          %v427 = vpop.xlane.xlu0 %426
          %v428 = vcvt.f32.s32 %v427
          %v429 = vcvt.f32.s32 %v423
          %v430 = vshll.u32 %v429, 16
          %v431 = vadd.s32 %v430, %v428
          %vm432 = vcmp.eq.s32.totalorder %v156, %v431
          %v433 = vsel %vm432, 1, 0
          %v434 = vcvt.s32.f32 %v433
          %v435 = vrot.slane %v434, 4
          %v436 = vmax.f32 %v434, %v435
          %v437 = vrot.slane %v436, 2
          %v438 = vmax.f32 %v436, %v437
          %v439 = vrot.slane %v438, 1
          %v440 = vmax.f32 %v438, %v439
          %441 = vadd.xlane.f32.xlu0 %v440
          %v442 = vpop.xlane.xlu0 %441
          %vm443 = vcmp.eq.s32.totalorder %v156, 0
          %v444 = vsel %vm443, %v376, 0.0
          %vm445 = vcmp.eq.s32.totalorder %v156, 1
          %v446 = vsel %vm445, %v386, 0.0
          %v447 = vadd.f32 %v444, %v446
          %vm448 = vcmp.eq.s32.totalorder %v156, 2
          %v449 = vsel %vm448, %v408, 0.0
          %v450 = vadd.f32 %v447, %v449
          %vm451 = vcmp.eq.s32.totalorder %v156, 3
          %v452 = vsel %vm451, %v415, 0.0
          %v453 = vadd.f32 %v450, %v452
          %vm454 = vcmp.eq.s32.totalorder %v156, 4
          %v455 = vsel %vm454, %v442, 0.0
          %v456 = vadd.f32 %v453, %v455
          %457 = vst [vmem:[%s3] sm:$0x1] %v456
        $region36: #{sdpn_loss_forward.3} parent=27 // pred_fallthru
          _
        // Predicated region
        $region37: #{sdpn_loss_forward.3} parent=27 // pred_check
          %p458 = pneg %p76
        $region38: #{sdpn_loss_forward.3} parent=27 // pred_check_branch
          %460 = sbr.rel (%p458) target = $region40
        $region39: #{sdpn_loss_forward.3} parent=27 // pred_region
          %462 = vsyncadd [#allocation6], 0
          %s464 = sshll.u32 [#allocation5], 4
          %s465 = int_to_ptr.vmem [resolvable:$true] %s464
          %s466 = sshll.u32 %s2, 4
          %s467 = int_to_ptr.hbm [resolvable:$true] %s466
          %469 = dma.vmem_to_hbm [thread:$0]  %s465, 128, %s467, [#allocation6]
        $region40: #{sdpn_loss_forward.3} parent=27 // pred_fallthru
          _
        // Predicated region
        $region41: #{sdpn_loss_forward.3} parent=27 // pred_check
          %p470 = pneg %p97
        $region42: #{sdpn_loss_forward.3} parent=27 // pred_check_branch
          %472 = sbr.rel (%p470) target = $region44
        $region43: #{sdpn_loss_forward.3} parent=27 // pred_region
          _
        $region44: #{sdpn_loss_forward.3} parent=27 // pred_fallthru
          _
        // Predicated region
        $region45: #{sdpn_loss_forward.3} parent=27 // pred_check
          %p473 = pneg %p76
        $region46: #{sdpn_loss_forward.3} parent=27 // pred_check_branch
          %475 = sbr.rel (%p473) target = $region48
        $region47: #{sdpn_loss_forward.3} parent=27 // pred_region
          %477 = dma.done [#allocation6], 128
        $region48: #{sdpn_loss_forward.3} parent=27 // pred_fallthru
          _
        // Predicated region
        $region49: #{sdpn_loss_forward.3} parent=27 // pred_check
          %p478 = pneg %p97
        $region50: #{sdpn_loss_forward.3} parent=27 // pred_check_branch
          %480 = sbr.rel (%p478) target = $region52
        $region51: #{sdpn_loss_forward.3} parent=27 // pred_region
          _
        $region52: #{sdpn_loss_forward.3} parent=27 // pred_fallthru
          _
      $region28: #{sdpn_loss_forward.3} parent=5 // pred_fallthru
        _
      %p481 = scmp.le.s32.totalorder 2, %s11
      // Predicated region
      $region53: #{sdpn_loss_forward.3} parent=5 // pred_check
        %p482 = pneg %p481
      $region54: #{sdpn_loss_forward.3} parent=5 // pred_check_branch
        %484 = sbr.rel (%p482) target = $region56
      $region55: #{sdpn_loss_forward.3} parent=5 // pred_region
        %s485 = ssub.s32 %s11, 2
      $region56: #{sdpn_loss_forward.3} parent=5 // pred_fallthru
        _
    $region6: #{sdpn_loss_forward.3} parent=1 // loop_footer
      %s15 = sadd.s32 1, %s11
    $region7: #{sdpn_loss_forward.3} parent=1 // loop_footer_branch
      %10 = sbr.rel target = $region3
    $region8: #{sdpn_loss_forward.3} parent=1 // loop_exit
      _
    %486 = vsyncpa [#allocation6], 1
    %s487 = scalar_lea.sflag [#allocation6], 1
    %488 = vsyncpa %s487, 1

</llo_original>
